<compile_context>
chip_gen: v6e
topology: v6e:2x2x1
jax: 0.10.0
libtpu: 0.0.40
codegen_flags: <defaults>
</compile_context>

<pallas_src>
import functools

import jax
import jax.numpy as jnp
from jax.experimental import pallas as pl
from jax.experimental.pallas import tpu as pltpu


# ---------------------------------------------------------------------------
# Fully fused forward kernel (single VMEM block, no grid)
# ---------------------------------------------------------------------------
def _fused_forward_kernel(
    x1_ref, x2_ref, x1t_ref, x2t_ref,   # (B, 768) f32 each
    w_ref,                              # (1152, 768) bf16 packed weight slab
    b_ref,                              # (8, 768)    f32  packed bias slab
    o_ref,                              # (B, 1) f32
    *, batch,
):
    B = batch
    f32, bf16 = jnp.float32, jnp.bfloat16

    def dot(a, w):
        # bf16 operands on the MXU, f32 accumulation.
        return jnp.dot(a.astype(bf16), w, preferred_element_type=f32)

    # ---- dispatch 1: grouped first layer -----------------------------------
    # rows = [x1; x2; x1_t; x2_t], cols of w = [fc1_1 | fc2_1 | fc3 | fc4]
    x_stack = jnp.concatenate(
        [x1_ref[...], x2_ref[...], x1t_ref[...], x2t_ref[...]], axis=0)  # (4B,768)
    y = jnp.maximum(dot(x_stack, w_ref[0:768, :]) + b_ref[0:1, :], 0.0)  # (4B,768)
    a1 = y[0 * B:1 * B, 0:256]                                   # fc1_1(x1)
    a2 = y[1 * B:2 * B, 256:512]                                 # fc2_1(x2)
    a34 = jnp.concatenate(                                       # [fc3(x1_t)|fc4(x2_t)]
        [y[2 * B:3 * B, 512:640], y[3 * B:4 * B, 640:768]], axis=1)       # (B,256)

    # ---- dispatch 2: fused fc1_2 | fc2_2 | fc6 ------------------------------
    z_in = jnp.concatenate([a1, a2, a34], axis=0)                # (3B,256)
    z = jnp.maximum(dot(z_in, w_ref[768:1024, 0:384]) + b_ref[1:2, 0:384], 0.0)
    h1 = z[0 * B:1 * B, 0:128]                                   # fc1_2
    h2 = z[1 * B:2 * B, 128:256]                                 # fc2_2
    years = z[2 * B:3 * B, 256:384]                              # fc6

    # ---- dispatch 3: fc5 on concat(h1, h2) ----------------------------------
    sent_in = jnp.concatenate([h1, h2], axis=1)                  # (B,256)
    sentence = jnp.maximum(
        dot(sent_in, w_ref[768:1024, 384:512]) + b_ref[1:2, 384:512], 0.0)

    # ---- dispatch 4: head fc 256 -> 128 -------------------------------------
    hid = jnp.concatenate([sentence, years], axis=1)             # (B,256)
    h = jnp.maximum(
        dot(hid, w_ref[768:1024, 512:640]) + b_ref[1:2, 512:640], 0.0)    # (B,128)

    # ---- dispatches 5-7: padded head tail (128->32, 32->8, 8->1) ------------
    # Weights / biases are zero-padded to 128 lanes, so dead lanes stay exact 0.
    h = jnp.maximum(dot(h, w_ref[1024:1152, 0:128]) + b_ref[2:3, 0:128], 0.0)
    h = jnp.maximum(dot(h, w_ref[1024:1152, 128:256]) + b_ref[2:3, 128:256], 0.0)
    pred = dot(h, w_ref[1024:1152, 256:384]) + b_ref[2:3, 256:384]        # col 0 valid

    o_ref[...] = jax.nn.sigmoid(pred[:, 0:1]).astype(o_ref.dtype)


# ---------------------------------------------------------------------------
# Parameter construction (deterministic, PyTorch-like uniform init)
# ---------------------------------------------------------------------------
def init_linear(key, in_f, out_f):
    kw, kb = jax.random.split(key)
    bound = 1.0 / (float(in_f) ** 0.5)
    w = jax.random.uniform(kw, (in_f, out_f), jnp.float32, -bound, bound)
    b = jax.random.uniform(kb, (out_f,), jnp.float32, -bound, bound)
    return w, b


def init_model_params(key):
    dims = {
        "fc1_1": (768, 256), "fc1_2": (256, 128),
        "fc2_1": (768, 256), "fc2_2": (256, 128),
        "fc3": (768, 128), "fc4": (768, 128),
        "fc5": (256, 128), "fc6": (256, 128),
        "head0": (256, 128), "head1": (128, 32),
        "head2": (32, 8), "head3": (8, 1),
    }
    params = {}
    keys = jax.random.split(key, len(dims))
    for k, (name, (i, o)) in zip(keys, dims.items()):
        params[name] = init_linear(k, i, o)
    return params


def prepare_params(params):
    """One-time layout prep: pack everything into a bf16 weight slab + f32 bias slab.

    Weight slab (1152, 768) bf16:
      rows [   0,  768): [fc1_1 | fc2_1 | fc3 | fc4]                 (768 x 768)
      rows [ 768, 1024): [fc1_2 | fc2_2 | fc6 | fc5 | head0 | 0]     (256 x 768)
      rows [1024, 1152): [head1_pad | head2_pad | head3_pad | 0]     (128 x 768)
    Bias slab (8, 768) f32, rows 0/1/2 mirror the column layout above.
    """
    bf16, f32 = jnp.bfloat16, jnp.float32

    def w(name):
        return params[name][0].astype(bf16)

    def b(name):
        return params[name][1].astype(f32)

    row0 = jnp.concatenate([w("fc1_1"), w("fc2_1"), w("fc3"), w("fc4")], axis=1)
    row1 = jnp.concatenate(
        [w("fc1_2"), w("fc2_2"), w("fc6"), w("fc5"), w("head0"),
         jnp.zeros((256, 128), bf16)], axis=1)

    wh1p = jnp.zeros((128, 128), bf16).at[:, 0:32].set(w("head1"))
    wh2p = jnp.zeros((128, 128), bf16).at[0:32, 0:8].set(w("head2"))
    wh3p = jnp.zeros((128, 128), bf16).at[0:8, 0:1].set(w("head3"))
    row2 = jnp.concatenate([wh1p, wh2p, wh3p, jnp.zeros((128, 384), bf16)], axis=1)

    w_slab = jnp.concatenate([row0, row1, row2], axis=0)          # (1152, 768)

    b0 = jnp.concatenate([b("fc1_1"), b("fc2_1"), b("fc3"), b("fc4")])
    b1 = jnp.concatenate([b("fc1_2"), b("fc2_2"), b("fc6"), b("fc5"), b("head0"),
                          jnp.zeros((128,), f32)])
    b2 = (jnp.zeros((768,), f32)
          .at[0:32].set(b("head1"))
          .at[128:136].set(b("head2"))
          .at[256:257].set(b("head3")))
    b_slab = jnp.zeros((8, 768), f32).at[0].set(b0).at[1].set(b1).at[2].set(b2)

    return {"w_slab": w_slab, "b_slab": b_slab}


# ---------------------------------------------------------------------------
# Model forward: one fused pallas_call
# ---------------------------------------------------------------------------
@jax.jit
def model_forward(prepped, x1, x2, x1_t, x2_t):
    B = x1.shape[0]
    # Keep the batch a multiple of 8 so all in-kernel row-block slices land on
    # sublane-tile boundaries (and 4B is a multiple of 16 for bf16 packing).
    Bp = ((B + 7) // 8) * 8
    if Bp != B:
        pad = ((0, Bp - B), (0, 0))
        x1, x2, x1_t, x2_t = (jnp.pad(v, pad) for v in (x1, x2, x1_t, x2_t))

    kernel = functools.partial(_fused_forward_kernel, batch=Bp)
    out = pl.pallas_call(
        kernel,
        out_shape=jax.ShapeDtypeStruct((Bp, 1), jnp.float32),
        in_specs=[pl.BlockSpec(memory_space=pltpu.VMEM)] * 6,
        out_specs=pl.BlockSpec(memory_space=pltpu.VMEM),
    )(x1, x2, x1_t, x2_t, prepped["w_slab"], prepped["b_slab"])
    return out[:B]


# ---------------------------------------------------------------------------
# Pure-JAX reference (same bf16 weights, layer-by-layer) for a correctness check
# ---------------------------------------------------------------------------
def reference_forward(prepped, x1, x2, x1_t, x2_t):
    W, Bb = prepped["w_slab"], prepped["b_slab"]
    f32, bf16 = jnp.float32, jnp.bfloat16

    def lin(x, w, b, relu=True):
        y = jnp.dot(x.astype(bf16), w, preferred_element_type=f32) + b
        return jnp.maximum(y, 0.0) if relu else y

    a1 = lin(x1, W[0:768, 0:256], Bb[0, 0:256])
    a2 = lin(x2, W[0:768, 256:512], Bb[0, 256:512])
    a3 = lin(x1_t, W[0:768, 512:640], Bb[0, 512:640])
    a4 = lin(x2_t, W[0:768, 640:768], Bb[0, 640:768])
    h1 = lin(a1, W[768:1024, 0:128], Bb[1, 0:128])
    h2 = lin(a2, W[768:1024, 128:256], Bb[1, 128:256])
    years = lin(jnp.concatenate([a3, a4], axis=1), W[768:1024, 256:384], Bb[1, 256:384])
    sentence = lin(jnp.concatenate([h1, h2], axis=1), W[768:1024, 384:512], Bb[1, 384:512])
    h = lin(jnp.concatenate([sentence, years], axis=1), W[768:1024, 512:640], Bb[1, 512:640])
    h = lin(h, W[1024:1152, 0:32], Bb[2, 0:32])                  # 128 -> 32
    h = lin(h, W[1024:1056, 128:136], Bb[2, 128:136])            # 32 -> 8
    pred = lin(h, W[1024:1032, 256:257], Bb[2, 256:257], relu=False)  # 8 -> 1
    return jax.nn.sigmoid(pred)


if __name__ == "__main__":
    key = jax.random.PRNGKey(0)
    kp, k1, k2, k3, k4 = jax.random.split(key, 5)

    B = 8  # small batch (multiple of 8)
    params = init_model_params(kp)
    prepped = prepare_params(params)

    x1 = jax.random.normal(k1, (B, 768), jnp.float32)
    x2 = jax.random.normal(k2, (B, 768), jnp.float32)
    x1_t = jax.random.normal(k3, (B, 768), jnp.float32)
    x2_t = jax.random.normal(k4, (B, 768), jnp.float32)

    pred = model_forward(prepped, x1, x2, x1_t, x2_t)
    jax.block_until_ready(pred)

    assert pred.shape == (B, 1), pred.shape
    ref = reference_forward(prepped, x1, x2, x1_t, x2_t)
    assert jnp.allclose(pred, ref, atol=5e-3, rtol=5e-3), (pred, ref)
    assert bool(jnp.all((pred >= 0.0) & (pred <= 1.0)))
    print("KERNEL_OK")
</pallas_src>

<mosaic_0001>
module attributes {stable_mosaic.version = 11 : i64} {
  func.func @_fused_forward_kernel(%arg0: memref<8x768xf32, #tpu.memory_space<vmem>>, %arg1: memref<8x768xf32, #tpu.memory_space<vmem>>, %arg2: memref<8x768xf32, #tpu.memory_space<vmem>>, %arg3: memref<8x768xf32, #tpu.memory_space<vmem>>, %arg4: memref<1152x768xbf16, #tpu.memory_space<vmem>>, %arg5: memref<8x768xf32, #tpu.memory_space<vmem>>, %arg6: memref<8x1xf32, #tpu.memory_space<vmem>>) attributes {dimension_semantics = [], scalar_prefetch = 0 : i64, scratch_operands = 0 : i64, tpu.core_type = #tpu.core_type<tc>} {
    %c0 = arith.constant 0 : index
    %c0_0 = arith.constant 0 : index
    %0 = vector.load %arg0[%c0, %c0_0] : memref<8x768xf32, #tpu.memory_space<vmem>>, vector<8x768xf32>
    %c0_1 = arith.constant 0 : index
    %c0_2 = arith.constant 0 : index
    %1 = vector.load %arg1[%c0_1, %c0_2] : memref<8x768xf32, #tpu.memory_space<vmem>>, vector<8x768xf32>
    %c0_3 = arith.constant 0 : index
    %c0_4 = arith.constant 0 : index
    %2 = vector.load %arg2[%c0_3, %c0_4] : memref<8x768xf32, #tpu.memory_space<vmem>>, vector<8x768xf32>
    %c0_5 = arith.constant 0 : index
    %c0_6 = arith.constant 0 : index
    %3 = vector.load %arg3[%c0_5, %c0_6] : memref<8x768xf32, #tpu.memory_space<vmem>>, vector<8x768xf32>
    %4 = tpu.concatenate %0, %1, %2, %3 in 0 : vector<8x768xf32>, vector<8x768xf32>, vector<8x768xf32>, vector<8x768xf32> -> vector<32x768xf32>
    %c0_7 = arith.constant 0 : index
    %c0_8 = arith.constant 0 : index
    %5 = vector.load %arg4[%c0_7, %c0_8] : memref<1152x768xbf16, #tpu.memory_space<vmem>>, vector<768x768xbf16>
    %6 = arith.truncf %4 : vector<32x768xf32> to vector<32x768xbf16>
    %cst = arith.constant dense<0.000000e+00> : vector<32x768xf32>
    %7 = tpu.matmul %6, %5, %cst {dimension_numbers = #tpu.dot_dimension_numbers<[1], [0], [0], [1], [0, 0, 1, 1], [], []>} : vector<32x768xbf16>, vector<768x768xbf16>, vector<32x768xf32> -> vector<32x768xf32>
    %c0_9 = arith.constant 0 : index
    %c0_10 = arith.constant 0 : index
    %8 = vector.load %arg5[%c0_9, %c0_10] : memref<8x768xf32, #tpu.memory_space<vmem>>, vector<1x768xf32>
    %9 = vector.broadcast %8 : vector<1x768xf32> to vector<32x768xf32>
    %10 = arith.addf %7, %9 : vector<32x768xf32>
    %cst_11 = arith.constant 0.000000e+00 : f32
    %11 = vector.broadcast %cst_11 : f32 to vector<32x768xf32>
    %12 = arith.maximumf %10, %11 : vector<32x768xf32>
    %13 = vector.extract_strided_slice %12 {offsets = [0, 0], sizes = [8, 256], strides = [1, 1]} : vector<32x768xf32> to vector<8x256xf32>
    %14 = vector.extract_strided_slice %12 {offsets = [8, 256], sizes = [8, 256], strides = [1, 1]} : vector<32x768xf32> to vector<8x256xf32>
    %15 = vector.extract_strided_slice %12 {offsets = [16, 512], sizes = [8, 128], strides = [1, 1]} : vector<32x768xf32> to vector<8x128xf32>
    %16 = vector.extract_strided_slice %12 {offsets = [24, 640], sizes = [8, 128], strides = [1, 1]} : vector<32x768xf32> to vector<8x128xf32>
    %17 = tpu.concatenate %15, %16 in 1 : vector<8x128xf32>, vector<8x128xf32> -> vector<8x256xf32>
    %18 = tpu.concatenate %13, %14, %17 in 0 : vector<8x256xf32>, vector<8x256xf32>, vector<8x256xf32> -> vector<24x256xf32>
    %c768 = arith.constant 768 : index
    %c0_12 = arith.constant 0 : index
    %19 = vector.load %arg4[%c768, %c0_12] : memref<1152x768xbf16, #tpu.memory_space<vmem>>, vector<256x384xbf16>
    %20 = arith.truncf %18 : vector<24x256xf32> to vector<24x256xbf16>
    %cst_13 = arith.constant dense<0.000000e+00> : vector<24x384xf32>
    %21 = tpu.matmul %20, %19, %cst_13 {dimension_numbers = #tpu.dot_dimension_numbers<[1], [0], [0], [1], [0, 0, 1, 1], [], []>} : vector<24x256xbf16>, vector<256x384xbf16>, vector<24x384xf32> -> vector<24x384xf32>
    %c1 = arith.constant 1 : index
    %c0_14 = arith.constant 0 : index
    %22 = vector.load %arg5[%c1, %c0_14] : memref<8x768xf32, #tpu.memory_space<vmem>>, vector<1x384xf32>
    %23 = vector.broadcast %22 : vector<1x384xf32> to vector<24x384xf32>
    %24 = arith.addf %21, %23 : vector<24x384xf32>
    %cst_15 = arith.constant 0.000000e+00 : f32
    %25 = vector.broadcast %cst_15 : f32 to vector<24x384xf32>
    %26 = arith.maximumf %24, %25 : vector<24x384xf32>
    %27 = vector.extract_strided_slice %26 {offsets = [0, 0], sizes = [8, 128], strides = [1, 1]} : vector<24x384xf32> to vector<8x128xf32>
    %28 = vector.extract_strided_slice %26 {offsets = [8, 128], sizes = [8, 128], strides = [1, 1]} : vector<24x384xf32> to vector<8x128xf32>
    %29 = vector.extract_strided_slice %26 {offsets = [16, 256], sizes = [8, 128], strides = [1, 1]} : vector<24x384xf32> to vector<8x128xf32>
    %30 = tpu.concatenate %27, %28 in 1 : vector<8x128xf32>, vector<8x128xf32> -> vector<8x256xf32>
    %c768_16 = arith.constant 768 : index
    %c384 = arith.constant 384 : index
    %31 = vector.load %arg4[%c768_16, %c384] : memref<1152x768xbf16, #tpu.memory_space<vmem>>, vector<256x128xbf16>
    %32 = arith.truncf %30 : vector<8x256xf32> to vector<8x256xbf16>
    %cst_17 = arith.constant dense<0.000000e+00> : vector<8x128xf32>
    %33 = tpu.matmul %32, %31, %cst_17 {dimension_numbers = #tpu.dot_dimension_numbers<[1], [0], [0], [1], [0, 0, 1, 1], [], []>} : vector<8x256xbf16>, vector<256x128xbf16>, vector<8x128xf32> -> vector<8x128xf32>
    %c1_18 = arith.constant 1 : index
    %c384_19 = arith.constant 384 : index
    %34 = vector.load %arg5[%c1_18, %c384_19] : memref<8x768xf32, #tpu.memory_space<vmem>>, vector<1x128xf32>
    %35 = vector.broadcast %34 : vector<1x128xf32> to vector<8x128xf32>
    %36 = arith.addf %33, %35 : vector<8x128xf32>
    %cst_20 = arith.constant 0.000000e+00 : f32
    %37 = vector.broadcast %cst_20 : f32 to vector<8x128xf32>
    %38 = arith.maximumf %36, %37 : vector<8x128xf32>
    %39 = tpu.concatenate %38, %29 in 1 : vector<8x128xf32>, vector<8x128xf32> -> vector<8x256xf32>
    %c768_21 = arith.constant 768 : index
    %c512 = arith.constant 512 : index
    %40 = vector.load %arg4[%c768_21, %c512] : memref<1152x768xbf16, #tpu.memory_space<vmem>>, vector<256x128xbf16>
    %41 = arith.truncf %39 : vector<8x256xf32> to vector<8x256xbf16>
    %cst_22 = arith.constant dense<0.000000e+00> : vector<8x128xf32>
    %42 = tpu.matmul %41, %40, %cst_22 {dimension_numbers = #tpu.dot_dimension_numbers<[1], [0], [0], [1], [0, 0, 1, 1], [], []>} : vector<8x256xbf16>, vector<256x128xbf16>, vector<8x128xf32> -> vector<8x128xf32>
    %c1_23 = arith.constant 1 : index
    %c512_24 = arith.constant 512 : index
    %43 = vector.load %arg5[%c1_23, %c512_24] : memref<8x768xf32, #tpu.memory_space<vmem>>, vector<1x128xf32>
    %44 = vector.broadcast %43 : vector<1x128xf32> to vector<8x128xf32>
    %45 = arith.addf %42, %44 : vector<8x128xf32>
    %cst_25 = arith.constant 0.000000e+00 : f32
    %46 = vector.broadcast %cst_25 : f32 to vector<8x128xf32>
    %47 = arith.maximumf %45, %46 : vector<8x128xf32>
    %c1024 = arith.constant 1024 : index
    %c0_26 = arith.constant 0 : index
    %48 = vector.load %arg4[%c1024, %c0_26] : memref<1152x768xbf16, #tpu.memory_space<vmem>>, vector<128x128xbf16>
    %49 = arith.truncf %47 : vector<8x128xf32> to vector<8x128xbf16>
    %cst_27 = arith.constant dense<0.000000e+00> : vector<8x128xf32>
    %50 = tpu.matmul %49, %48, %cst_27 {dimension_numbers = #tpu.dot_dimension_numbers<[1], [0], [0], [1], [0, 0, 1, 1], [], []>} : vector<8x128xbf16>, vector<128x128xbf16>, vector<8x128xf32> -> vector<8x128xf32>
    %c2 = arith.constant 2 : index
    %c0_28 = arith.constant 0 : index
    %51 = vector.load %arg5[%c2, %c0_28] : memref<8x768xf32, #tpu.memory_space<vmem>>, vector<1x128xf32>
    %52 = vector.broadcast %51 : vector<1x128xf32> to vector<8x128xf32>
    %53 = arith.addf %50, %52 : vector<8x128xf32>
    %cst_29 = arith.constant 0.000000e+00 : f32
    %54 = vector.broadcast %cst_29 : f32 to vector<8x128xf32>
    %55 = arith.maximumf %53, %54 : vector<8x128xf32>
    %c1024_30 = arith.constant 1024 : index
    %c128 = arith.constant 128 : index
    %56 = vector.load %arg4[%c1024_30, %c128] : memref<1152x768xbf16, #tpu.memory_space<vmem>>, vector<128x128xbf16>
    %57 = arith.truncf %55 : vector<8x128xf32> to vector<8x128xbf16>
    %cst_31 = arith.constant dense<0.000000e+00> : vector<8x128xf32>
    %58 = tpu.matmul %57, %56, %cst_31 {dimension_numbers = #tpu.dot_dimension_numbers<[1], [0], [0], [1], [0, 0, 1, 1], [], []>} : vector<8x128xbf16>, vector<128x128xbf16>, vector<8x128xf32> -> vector<8x128xf32>
    %c2_32 = arith.constant 2 : index
    %c128_33 = arith.constant 128 : index
    %59 = vector.load %arg5[%c2_32, %c128_33] : memref<8x768xf32, #tpu.memory_space<vmem>>, vector<1x128xf32>
    %60 = vector.broadcast %59 : vector<1x128xf32> to vector<8x128xf32>
    %61 = arith.addf %58, %60 : vector<8x128xf32>
    %cst_34 = arith.constant 0.000000e+00 : f32
    %62 = vector.broadcast %cst_34 : f32 to vector<8x128xf32>
    %63 = arith.maximumf %61, %62 : vector<8x128xf32>
    %c1024_35 = arith.constant 1024 : index
    %c256 = arith.constant 256 : index
    %64 = vector.load %arg4[%c1024_35, %c256] : memref<1152x768xbf16, #tpu.memory_space<vmem>>, vector<128x128xbf16>
    %65 = arith.truncf %63 : vector<8x128xf32> to vector<8x128xbf16>
    %cst_36 = arith.constant dense<0.000000e+00> : vector<8x128xf32>
    %66 = tpu.matmul %65, %64, %cst_36 {dimension_numbers = #tpu.dot_dimension_numbers<[1], [0], [0], [1], [0, 0, 1, 1], [], []>} : vector<8x128xbf16>, vector<128x128xbf16>, vector<8x128xf32> -> vector<8x128xf32>
    %c2_37 = arith.constant 2 : index
    %c256_38 = arith.constant 256 : index
    %67 = vector.load %arg5[%c2_37, %c256_38] : memref<8x768xf32, #tpu.memory_space<vmem>>, vector<1x128xf32>
    %68 = vector.broadcast %67 : vector<1x128xf32> to vector<8x128xf32>
    %69 = arith.addf %66, %68 : vector<8x128xf32>
    %70 = vector.extract_strided_slice %69 {offsets = [0, 0], sizes = [8, 1], strides = [1, 1]} : vector<8x128xf32> to vector<8x1xf32>
    %71 = arith.negf %70 : vector<8x1xf32>
    %72 = math.exp %71 : vector<8x1xf32>
    %cst_39 = arith.constant 1.000000e+00 : f32
    %73 = vector.broadcast %cst_39 : f32 to vector<8x1xf32>
    %74 = arith.addf %73, %72 : vector<8x1xf32>
    %75 = arith.divf %73, %74 : vector<8x1xf32>
    %c0_40 = arith.constant 0 : index
    %c0_41 = arith.constant 0 : index
    %76 = vector.load %arg6[%c0_40, %c0_41] : memref<8x1xf32, #tpu.memory_space<vmem>>, vector<8x1xf32>
    tpu.vector_store %arg6[%c0_40, %c0_41], %75 {strides = array<i32>} : memref<8x1xf32, #tpu.memory_space<vmem>>, vector<8x1xf32>,
    return
  }
}

</mosaic_0001>

<llo_original>
// kernel: model_forward.1
$region0: #{model_forward.1}
  #allocation0 [shape = 'u32[]', space=smem, size = 0x4, offset = 0x4, fixed_abs, tag = 'smem constant byte address 0x4 - core index']
  #allocation1 [shape = 'u32[144,128]{1,0:T(1,128)}', space=vmem, size = 0x12000, scoped, tag = 'internal scratch']
  %s0 = inlined_call_operand.hbm [shape: f32[8,768], index: 0, kind: input, shape index: {}]
  %s1 = inlined_call_operand.hbm [shape: f32[8,768], index: 1, kind: input, shape index: {}]
  %s2 = inlined_call_operand.hbm [shape: f32[8,768], index: 2, kind: input, shape index: {}]
  %s3 = inlined_call_operand.hbm [shape: f32[8,768], index: 3, kind: input, shape index: {}]
  %s4 = inlined_call_operand.hbm [shape: bf16[1152,768], index: 4, kind: input, shape index: {}]
  %s5 = inlined_call_operand.hbm [shape: f32[8,768], index: 5, kind: input, shape index: {}]
  %s6 = inlined_call_operand.vmem [shape: f32[8,1], index: 6, kind: output, shape index: {}]
  %s7 = sld [smem:[#allocation0]]
  $region58: #{model_forward.1} parent=0
    _
  %s9 = ssub.s32 1, %s7
  %s10 = scalar_select 0, %s9, %s7
  $region1: #{model_forward.1} parent=0
    #allocation2 [shape = 'u8[24576]{0}', space=vmem, size = 0x6000, scoped, tag = 'input window, operand 0, single buffered']
    #allocation3 [shape = 's32[1]{0}', space=sflag, size = 0x4, scoped, tag = 'scoped memory for model_forward.1']
    #allocation4 [shape = 'u8[24576]{0}', space=vmem, size = 0x6000, scoped, tag = 'input window, operand 1, single buffered']
    #allocation5 [shape = 's32[1]{0}', space=sflag, size = 0x4, scoped, tag = 'scoped memory for model_forward.1']
    #allocation6 [shape = 'u8[24576]{0}', space=vmem, size = 0x6000, scoped, tag = 'input window, operand 2, single buffered']
    #allocation7 [shape = 'u8[24576]{0}', space=vmem, size = 0x6000, scoped, tag = 'input window, operand 3, single buffered']
    #allocation8 [shape = 's32[1]{0}', space=sflag, size = 0x4, scoped, tag = 'scoped memory for model_forward.1']
    #allocation9 [shape = 'u8[1769472]{0}', space=vmem, size = 0x1b0000, scoped, tag = 'input window, operand 4, single buffered']
    #allocation10 [shape = 'u8[24576]{0}', space=vmem, size = 0x6000, scoped, tag = 'input window, operand 5, single buffered']
    #allocation11 [shape = 's32[1]{0}', space=sflag, size = 0x4, scoped, tag = 'scoped memory for model_forward.1']
    %11 = vsyncpa [#allocation3], 0
    %12 = vsyncpa [#allocation5], 0
    %13 = vsyncpa [#allocation8], 0
    %14 = vsyncpa [#allocation11], 0
    // Predicated region
    $region2: #{model_forward.1} parent=1 // pred_check
      _
    $region3: #{model_forward.1} parent=1 // pred_check_branch
      %16 = sbr.rel (0) target = $region5
    $region4: #{model_forward.1} parent=1 // pred_region
      %s18 = ssub.s32 768, 768
      %19 = vsyncadd [#allocation3], %s18
      %s21 = sshll.u32 [#allocation2], 4
      %s22 = int_to_ptr.vmem [resolvable:$true] %s21
      %24 = dma.hbm_to_vmem [thread:$0]  %s0, 768, %s22, [#allocation3]
    $region5: #{model_forward.1} parent=1 // pred_fallthru
      _
    // Predicated region
    $region6: #{model_forward.1} parent=1 // pred_check
      _
    $region7: #{model_forward.1} parent=1 // pred_check_branch
      %26 = sbr.rel (0) target = $region9
    $region8: #{model_forward.1} parent=1 // pred_region
      %s28 = ssub.s32 768, 768
      %29 = vsyncadd [#allocation5], %s28
      %s31 = sshll.u32 [#allocation4], 4
      %s32 = int_to_ptr.vmem [resolvable:$true] %s31
      %34 = dma.hbm_to_vmem [thread:$0]  %s1, 768, %s32, [#allocation5]
    $region9: #{model_forward.1} parent=1 // pred_fallthru
      _
    // Predicated region
    $region10: #{model_forward.1} parent=1 // pred_check
      _
    $region11: #{model_forward.1} parent=1 // pred_check_branch
      %36 = sbr.rel (0) target = $region13
    $region12: #{model_forward.1} parent=1 // pred_region
      %s38 = ssub.s32 768, 768
      %39 = vsyncadd [#allocation5], %s38
      %s41 = sshll.u32 [#allocation6], 4
      %s42 = int_to_ptr.vmem [resolvable:$true] %s41
      %44 = dma.hbm_to_vmem [thread:$0]  %s2, 768, %s42, [#allocation5]
    $region13: #{model_forward.1} parent=1 // pred_fallthru
      _
    // Predicated region
    $region14: #{model_forward.1} parent=1 // pred_check
      _
    $region15: #{model_forward.1} parent=1 // pred_check_branch
      %46 = sbr.rel (0) target = $region17
    $region16: #{model_forward.1} parent=1 // pred_region
      %s48 = ssub.s32 768, 768
      %49 = vsyncadd [#allocation8], %s48
      %s51 = sshll.u32 [#allocation7], 4
      %s52 = int_to_ptr.vmem [resolvable:$true] %s51
      %54 = dma.hbm_to_vmem [thread:$0]  %s3, 768, %s52, [#allocation8]
    $region17: #{model_forward.1} parent=1 // pred_fallthru
      _
    // Predicated region
    $region18: #{model_forward.1} parent=1 // pred_check
      _
    $region19: #{model_forward.1} parent=1 // pred_check_branch
      %56 = sbr.rel (0) target = $region21
    $region20: #{model_forward.1} parent=1 // pred_region
      %s58 = ssub.s32 55296, 55296
      %59 = vsyncadd [#allocation8], %s58
      %s60 = sshll.u32 [#allocation9], 4
      %s61 = int_to_ptr.vmem [resolvable:$true] %s60
      %66 = dma.hbm_to_vmem [thread:$0]  %s4, 55296, %s61, [#allocation8], 384, 384, 24
    $region21: #{model_forward.1} parent=1 // pred_fallthru
      _
    // Predicated region
    $region22: #{model_forward.1} parent=1 // pred_check
      _
    $region23: #{model_forward.1} parent=1 // pred_check_branch
      %68 = sbr.rel (0) target = $region25
    $region24: #{model_forward.1} parent=1 // pred_region
      %s70 = ssub.s32 768, 768
      %71 = vsyncadd [#allocation11], %s70
      %s73 = sshll.u32 [#allocation10], 4
      %s74 = int_to_ptr.vmem [resolvable:$true] %s73
      %76 = dma.hbm_to_vmem [thread:$0]  %s5, 768, %s74, [#allocation11]
    $region25: #{model_forward.1} parent=1 // pred_fallthru
      _
    // Predicated region
    $region26: #{model_forward.1} parent=1 // pred_check
      _
    $region27: #{model_forward.1} parent=1 // pred_check_branch
      %78 = sbr.rel (0) target = $region29
    $region28: #{model_forward.1} parent=1 // pred_region
      %79 = dma.done [#allocation3], 768
    $region29: #{model_forward.1} parent=1 // pred_fallthru
      _
    // Predicated region
    $region30: #{model_forward.1} parent=1 // pred_check
      _
    $region31: #{model_forward.1} parent=1 // pred_check_branch
      %81 = sbr.rel (0) target = $region33
    $region32: #{model_forward.1} parent=1 // pred_region
      %82 = dma.done [#allocation5], 768
    $region33: #{model_forward.1} parent=1 // pred_fallthru
      _
    // Predicated region
    $region34: #{model_forward.1} parent=1 // pred_check
      _
    $region35: #{model_forward.1} parent=1 // pred_check_branch
      %84 = sbr.rel (0) target = $region37
    $region36: #{model_forward.1} parent=1 // pred_region
      %85 = dma.done [#allocation5], 768
    $region37: #{model_forward.1} parent=1 // pred_fallthru
      _
    // Predicated region
    $region38: #{model_forward.1} parent=1 // pred_check
      _
    $region39: #{model_forward.1} parent=1 // pred_check_branch
      %87 = sbr.rel (0) target = $region41
    $region40: #{model_forward.1} parent=1 // pred_region
      %88 = dma.done [#allocation8], 768
    $region41: #{model_forward.1} parent=1 // pred_fallthru
      _
    // Predicated region
    $region42: #{model_forward.1} parent=1 // pred_check
      _
    $region43: #{model_forward.1} parent=1 // pred_check_branch
      %90 = sbr.rel (0) target = $region45
    $region44: #{model_forward.1} parent=1 // pred_region
      %91 = dma.done [#allocation8], 55296
    $region45: #{model_forward.1} parent=1 // pred_fallthru
      _
    // Predicated region
    $region46: #{model_forward.1} parent=1 // pred_check
      _
    $region47: #{model_forward.1} parent=1 // pred_check_branch
      %93 = sbr.rel (0) target = $region49
    $region48: #{model_forward.1} parent=1 // pred_region
      %94 = dma.done [#allocation11], 768
    $region49: #{model_forward.1} parent=1 // pred_fallthru
      _
    %v96 = vld [vmem:[#allocation2] sm:$0xff]
    %v97 = vld [vmem:[#allocation2 + $0x8] sm:$0xff]
    %v98 = vld [vmem:[#allocation2 + $0x10] sm:$0xff]
    %v99 = vld [vmem:[#allocation2 + $0x18] sm:$0xff]
    %v100 = vld [vmem:[#allocation2 + $0x20] sm:$0xff]
    %v101 = vld [vmem:[#allocation2 + $0x28] sm:$0xff]
    %v102 = vld [vmem:[#allocation4] sm:$0xff]
    %v103 = vld [vmem:[#allocation4 + $0x8] sm:$0xff]
    %v104 = vld [vmem:[#allocation4 + $0x10] sm:$0xff]
    %v105 = vld [vmem:[#allocation4 + $0x18] sm:$0xff]
    %v106 = vld [vmem:[#allocation4 + $0x20] sm:$0xff]
    %v107 = vld [vmem:[#allocation4 + $0x28] sm:$0xff]
    %v108 = vld [vmem:[#allocation6] sm:$0xff]
    %v109 = vld [vmem:[#allocation6 + $0x8] sm:$0xff]
    %v110 = vld [vmem:[#allocation6 + $0x10] sm:$0xff]
    %v111 = vld [vmem:[#allocation6 + $0x18] sm:$0xff]
    %v112 = vld [vmem:[#allocation6 + $0x20] sm:$0xff]
    %v113 = vld [vmem:[#allocation6 + $0x28] sm:$0xff]
    %v114 = vld [vmem:[#allocation7] sm:$0xff]
    %v115 = vld [vmem:[#allocation7 + $0x8] sm:$0xff]
    %v116 = vld [vmem:[#allocation7 + $0x10] sm:$0xff]
    %v117 = vld [vmem:[#allocation7 + $0x18] sm:$0xff]
    %v118 = vld [vmem:[#allocation7 + $0x20] sm:$0xff]
    %v119 = vld [vmem:[#allocation7 + $0x28] sm:$0xff]
    %v120 = vld [vmem:[#allocation9] sm:$0xff]
    %v121 = vld [vmem:[#allocation9 + $0x8] sm:$0xff]
    %v122 = vld [vmem:[#allocation9 + $0x10] sm:$0xff]
    %v123 = vld [vmem:[#allocation9 + $0x18] sm:$0xff]
    %v124 = vld [vmem:[#allocation9 + $0x20] sm:$0xff]
    %v125 = vld [vmem:[#allocation9 + $0x28] sm:$0xff]
    %v126 = vld [vmem:[#allocation9 + $0x30] sm:$0xff]
    %v127 = vld [vmem:[#allocation9 + $0x38] sm:$0xff]
    %v128 = vld [vmem:[#allocation9 + $0x40] sm:$0xff]
    %v129 = vld [vmem:[#allocation9 + $0x48] sm:$0xff]
    %v130 = vld [vmem:[#allocation9 + $0x50] sm:$0xff]
    %v131 = vld [vmem:[#allocation9 + $0x58] sm:$0xff]
    %v132 = vld [vmem:[#allocation9 + $0x60] sm:$0xff]
    %v133 = vld [vmem:[#allocation9 + $0x68] sm:$0xff]
    %v134 = vld [vmem:[#allocation9 + $0x70] sm:$0xff]
    %v135 = vld [vmem:[#allocation9 + $0x78] sm:$0xff]
    %v136 = vld [vmem:[#allocation9 + $0x80] sm:$0xff]
    %v137 = vld [vmem:[#allocation9 + $0x88] sm:$0xff]
    %v138 = vld [vmem:[#allocation9 + $0x90] sm:$0xff]
    %v139 = vld [vmem:[#allocation9 + $0x98] sm:$0xff]
    %v140 = vld [vmem:[#allocation9 + $0xa0] sm:$0xff]
    %v141 = vld [vmem:[#allocation9 + $0xa8] sm:$0xff]
    %v142 = vld [vmem:[#allocation9 + $0xb0] sm:$0xff]
    %v143 = vld [vmem:[#allocation9 + $0xb8] sm:$0xff]
    %v144 = vld [vmem:[#allocation9 + $0xc0] sm:$0xff]
    %v145 = vld [vmem:[#allocation9 + $0xc8] sm:$0xff]
    %v146 = vld [vmem:[#allocation9 + $0xd0] sm:$0xff]
    %v147 = vld [vmem:[#allocation9 + $0xd8] sm:$0xff]
    %v148 = vld [vmem:[#allocation9 + $0xe0] sm:$0xff]
    %v149 = vld [vmem:[#allocation9 + $0xe8] sm:$0xff]
    %v150 = vld [vmem:[#allocation9 + $0xf0] sm:$0xff]
    %v151 = vld [vmem:[#allocation9 + $0xf8] sm:$0xff]
    %v152 = vld [vmem:[#allocation9 + $0x100] sm:$0xff]
    %v153 = vld [vmem:[#allocation9 + $0x108] sm:$0xff]
    %v154 = vld [vmem:[#allocation9 + $0x110] sm:$0xff]
    %v155 = vld [vmem:[#allocation9 + $0x118] sm:$0xff]
    %v156 = vld [vmem:[#allocation9 + $0x120] sm:$0xff]
    %v157 = vld [vmem:[#allocation9 + $0x128] sm:$0xff]
    %v158 = vld [vmem:[#allocation9 + $0x130] sm:$0xff]
    %v159 = vld [vmem:[#allocation9 + $0x138] sm:$0xff]
    %v160 = vld [vmem:[#allocation9 + $0x140] sm:$0xff]
    %v161 = vld [vmem:[#allocation9 + $0x148] sm:$0xff]
    %v162 = vld [vmem:[#allocation9 + $0x150] sm:$0xff]
    %v163 = vld [vmem:[#allocation9 + $0x158] sm:$0xff]
    %v164 = vld [vmem:[#allocation9 + $0x160] sm:$0xff]
    %v165 = vld [vmem:[#allocation9 + $0x168] sm:$0xff]
    %v166 = vld [vmem:[#allocation9 + $0x170] sm:$0xff]
    %v167 = vld [vmem:[#allocation9 + $0x178] sm:$0xff]
    %v168 = vld [vmem:[#allocation9 + $0x180] sm:$0xff]
    %v169 = vld [vmem:[#allocation9 + $0x188] sm:$0xff]
    %v170 = vld [vmem:[#allocation9 + $0x190] sm:$0xff]
    %v171 = vld [vmem:[#allocation9 + $0x198] sm:$0xff]
    %v172 = vld [vmem:[#allocation9 + $0x1a0] sm:$0xff]
    %v173 = vld [vmem:[#allocation9 + $0x1a8] sm:$0xff]
    %v174 = vld [vmem:[#allocation9 + $0x1b0] sm:$0xff]
    %v175 = vld [vmem:[#allocation9 + $0x1b8] sm:$0xff]
    %v176 = vld [vmem:[#allocation9 + $0x1c0] sm:$0xff]
    %v177 = vld [vmem:[#allocation9 + $0x1c8] sm:$0xff]
    %v178 = vld [vmem:[#allocation9 + $0x1d0] sm:$0xff]
    %v179 = vld [vmem:[#allocation9 + $0x1d8] sm:$0xff]
    %v180 = vld [vmem:[#allocation9 + $0x1e0] sm:$0xff]
    %v181 = vld [vmem:[#allocation9 + $0x1e8] sm:$0xff]
    %v182 = vld [vmem:[#allocation9 + $0x1f0] sm:$0xff]
    %v183 = vld [vmem:[#allocation9 + $0x1f8] sm:$0xff]
    %v184 = vld [vmem:[#allocation9 + $0x200] sm:$0xff]
    %v185 = vld [vmem:[#allocation9 + $0x208] sm:$0xff]
    %v186 = vld [vmem:[#allocation9 + $0x210] sm:$0xff]
    %v187 = vld [vmem:[#allocation9 + $0x218] sm:$0xff]
    %v188 = vld [vmem:[#allocation9 + $0x220] sm:$0xff]
    %v189 = vld [vmem:[#allocation9 + $0x228] sm:$0xff]
    %v190 = vld [vmem:[#allocation9 + $0x230] sm:$0xff]
    %v191 = vld [vmem:[#allocation9 + $0x238] sm:$0xff]
    %v192 = vld [vmem:[#allocation9 + $0x240] sm:$0xff]
    %v193 = vld [vmem:[#allocation9 + $0x248] sm:$0xff]
    %v194 = vld [vmem:[#allocation9 + $0x250] sm:$0xff]
    %v195 = vld [vmem:[#allocation9 + $0x258] sm:$0xff]
    %v196 = vld [vmem:[#allocation9 + $0x260] sm:$0xff]
    %v197 = vld [vmem:[#allocation9 + $0x268] sm:$0xff]
    %v198 = vld [vmem:[#allocation9 + $0x270] sm:$0xff]
    %v199 = vld [vmem:[#allocation9 + $0x278] sm:$0xff]
    %v200 = vld [vmem:[#allocation9 + $0x280] sm:$0xff]
    %v201 = vld [vmem:[#allocation9 + $0x288] sm:$0xff]
    %v202 = vld [vmem:[#allocation9 + $0x290] sm:$0xff]
    %v203 = vld [vmem:[#allocation9 + $0x298] sm:$0xff]
    %v204 = vld [vmem:[#allocation9 + $0x2a0] sm:$0xff]
    %v205 = vld [vmem:[#allocation9 + $0x2a8] sm:$0xff]
    %v206 = vld [vmem:[#allocation9 + $0x2b0] sm:$0xff]
    %v207 = vld [vmem:[#allocation9 + $0x2b8] sm:$0xff]
    %v208 = vld [vmem:[#allocation9 + $0x2c0] sm:$0xff]
    %v209 = vld [vmem:[#allocation9 + $0x2c8] sm:$0xff]
    %v210 = vld [vmem:[#allocation9 + $0x2d0] sm:$0xff]
    %v211 = vld [vmem:[#allocation9 + $0x2d8] sm:$0xff]
    %v212 = vld [vmem:[#allocation9 + $0x2e0] sm:$0xff]
    %v213 = vld [vmem:[#allocation9 + $0x2e8] sm:$0xff]
    %v214 = vld [vmem:[#allocation9 + $0x2f0] sm:$0xff]
    %v215 = vld [vmem:[#allocation9 + $0x2f8] sm:$0xff]
    %v216 = vld [vmem:[#allocation9 + $0x300] sm:$0xff]
    %v217 = vld [vmem:[#allocation9 + $0x308] sm:$0xff]
    %v218 = vld [vmem:[#allocation9 + $0x310] sm:$0xff]
    %v219 = vld [vmem:[#allocation9 + $0x318] sm:$0xff]
    %v220 = vld [vmem:[#allocation9 + $0x320] sm:$0xff]
    %v221 = vld [vmem:[#allocation9 + $0x328] sm:$0xff]
    %v222 = vld [vmem:[#allocation9 + $0x330] sm:$0xff]
    %v223 = vld [vmem:[#allocation9 + $0x338] sm:$0xff]
    %v224 = vld [vmem:[#allocation9 + $0x340] sm:$0xff]
    %v225 = vld [vmem:[#allocation9 + $0x348] sm:$0xff]
    %v226 = vld [vmem:[#allocation9 + $0x350] sm:$0xff]
    %v227 = vld [vmem:[#allocation9 + $0x358] sm:$0xff]
    %v228 = vld [vmem:[#allocation9 + $0x360] sm:$0xff]
    %v229 = vld [vmem:[#allocation9 + $0x368] sm:$0xff]
    %v230 = vld [vmem:[#allocation9 + $0x370] sm:$0xff]
    %v231 = vld [vmem:[#allocation9 + $0x378] sm:$0xff]
    %v232 = vld [vmem:[#allocation9 + $0x380] sm:$0xff]
    %v233 = vld [vmem:[#allocation9 + $0x388] sm:$0xff]
    %v234 = vld [vmem:[#allocation9 + $0x390] sm:$0xff]
    %v235 = vld [vmem:[#allocation9 + $0x398] sm:$0xff]
    %v236 = vld [vmem:[#allocation9 + $0x3a0] sm:$0xff]
    %v237 = vld [vmem:[#allocation9 + $0x3a8] sm:$0xff]
    %v238 = vld [vmem:[#allocation9 + $0x3b0] sm:$0xff]
    %v239 = vld [vmem:[#allocation9 + $0x3b8] sm:$0xff]
    %v240 = vld [vmem:[#allocation9 + $0x3c0] sm:$0xff]
    %v241 = vld [vmem:[#allocation9 + $0x3c8] sm:$0xff]
    %v242 = vld [vmem:[#allocation9 + $0x3d0] sm:$0xff]
    %v243 = vld [vmem:[#allocation9 + $0x3d8] sm:$0xff]
    %v244 = vld [vmem:[#allocation9 + $0x3e0] sm:$0xff]
    %v245 = vld [vmem:[#allocation9 + $0x3e8] sm:$0xff]
    %v246 = vld [vmem:[#allocation9 + $0x3f0] sm:$0xff]
    %v247 = vld [vmem:[#allocation9 + $0x3f8] sm:$0xff]
    %v248 = vld [vmem:[#allocation9 + $0x400] sm:$0xff]
    %v249 = vld [vmem:[#allocation9 + $0x408] sm:$0xff]
    %v250 = vld [vmem:[#allocation9 + $0x410] sm:$0xff]
    %v251 = vld [vmem:[#allocation9 + $0x418] sm:$0xff]
    %v252 = vld [vmem:[#allocation9 + $0x420] sm:$0xff]
    %v253 = vld [vmem:[#allocation9 + $0x428] sm:$0xff]
    %v254 = vld [vmem:[#allocation9 + $0x430] sm:$0xff]
    %v255 = vld [vmem:[#allocation9 + $0x438] sm:$0xff]
    %v256 = vld [vmem:[#allocation9 + $0x440] sm:$0xff]
    %v257 = vld [vmem:[#allocation9 + $0x448] sm:$0xff]
    %v258 = vld [vmem:[#allocation9 + $0x450] sm:$0xff]
    %v259 = vld [vmem:[#allocation9 + $0x458] sm:$0xff]
    %v260 = vld [vmem:[#allocation9 + $0x460] sm:$0xff]
    %v261 = vld [vmem:[#allocation9 + $0x468] sm:$0xff]
    %v262 = vld [vmem:[#allocation9 + $0x470] sm:$0xff]
    %v263 = vld [vmem:[#allocation9 + $0x478] sm:$0xff]
    %v264 = vld [vmem:[#allocation9 + $0x480] sm:$0xff]
    %v265 = vld [vmem:[#allocation9 + $0x488] sm:$0xff]
    %v266 = vld [vmem:[#allocation9 + $0x490] sm:$0xff]
    %v267 = vld [vmem:[#allocation9 + $0x498] sm:$0xff]
    %v268 = vld [vmem:[#allocation9 + $0x4a0] sm:$0xff]
    %v269 = vld [vmem:[#allocation9 + $0x4a8] sm:$0xff]
    %v270 = vld [vmem:[#allocation9 + $0x4b0] sm:$0xff]
    %v271 = vld [vmem:[#allocation9 + $0x4b8] sm:$0xff]
    %v272 = vld [vmem:[#allocation9 + $0x4c0] sm:$0xff]
    %v273 = vld [vmem:[#allocation9 + $0x4c8] sm:$0xff]
    %v274 = vld [vmem:[#allocation9 + $0x4d0] sm:$0xff]
    %v275 = vld [vmem:[#allocation9 + $0x4d8] sm:$0xff]
    %v276 = vld [vmem:[#allocation9 + $0x4e0] sm:$0xff]
    %v277 = vld [vmem:[#allocation9 + $0x4e8] sm:$0xff]
    %v278 = vld [vmem:[#allocation9 + $0x4f0] sm:$0xff]
    %v279 = vld [vmem:[#allocation9 + $0x4f8] sm:$0xff]
    %v280 = vld [vmem:[#allocation9 + $0x500] sm:$0xff]
    %v281 = vld [vmem:[#allocation9 + $0x508] sm:$0xff]
    %v282 = vld [vmem:[#allocation9 + $0x510] sm:$0xff]
    %v283 = vld [vmem:[#allocation9 + $0x518] sm:$0xff]
    %v284 = vld [vmem:[#allocation9 + $0x520] sm:$0xff]
    %v285 = vld [vmem:[#allocation9 + $0x528] sm:$0xff]
    %v286 = vld [vmem:[#allocation9 + $0x530] sm:$0xff]
    %v287 = vld [vmem:[#allocation9 + $0x538] sm:$0xff]
    %v288 = vld [vmem:[#allocation9 + $0x540] sm:$0xff]
    %v289 = vld [vmem:[#allocation9 + $0x548] sm:$0xff]
    %v290 = vld [vmem:[#allocation9 + $0x550] sm:$0xff]
    %v291 = vld [vmem:[#allocation9 + $0x558] sm:$0xff]
    %v292 = vld [vmem:[#allocation9 + $0x560] sm:$0xff]
    %v293 = vld [vmem:[#allocation9 + $0x568] sm:$0xff]
    %v294 = vld [vmem:[#allocation9 + $0x570] sm:$0xff]
    %v295 = vld [vmem:[#allocation9 + $0x578] sm:$0xff]
    %v296 = vld [vmem:[#allocation9 + $0x580] sm:$0xff]
    %v297 = vld [vmem:[#allocation9 + $0x588] sm:$0xff]
    %v298 = vld [vmem:[#allocation9 + $0x590] sm:$0xff]
    %v299 = vld [vmem:[#allocation9 + $0x598] sm:$0xff]
    %v300 = vld [vmem:[#allocation9 + $0x5a0] sm:$0xff]
    %v301 = vld [vmem:[#allocation9 + $0x5a8] sm:$0xff]
    %v302 = vld [vmem:[#allocation9 + $0x5b0] sm:$0xff]
    %v303 = vld [vmem:[#allocation9 + $0x5b8] sm:$0xff]
    %v304 = vld [vmem:[#allocation9 + $0x5c0] sm:$0xff]
    %v305 = vld [vmem:[#allocation9 + $0x5c8] sm:$0xff]
    %v306 = vld [vmem:[#allocation9 + $0x5d0] sm:$0xff]
    %v307 = vld [vmem:[#allocation9 + $0x5d8] sm:$0xff]
    %v308 = vld [vmem:[#allocation9 + $0x5e0] sm:$0xff]
    %v309 = vld [vmem:[#allocation9 + $0x5e8] sm:$0xff]
    %v310 = vld [vmem:[#allocation9 + $0x5f0] sm:$0xff]
    %v311 = vld [vmem:[#allocation9 + $0x5f8] sm:$0xff]
    %v312 = vld [vmem:[#allocation9 + $0x600] sm:$0xff]
    %v313 = vld [vmem:[#allocation9 + $0x608] sm:$0xff]
    %v314 = vld [vmem:[#allocation9 + $0x610] sm:$0xff]
    %v315 = vld [vmem:[#allocation9 + $0x618] sm:$0xff]
    %v316 = vld [vmem:[#allocation9 + $0x620] sm:$0xff]
    %v317 = vld [vmem:[#allocation9 + $0x628] sm:$0xff]
    %v318 = vld [vmem:[#allocation9 + $0x630] sm:$0xff]
    %v319 = vld [vmem:[#allocation9 + $0x638] sm:$0xff]
    %v320 = vld [vmem:[#allocation9 + $0x640] sm:$0xff]
    %v321 = vld [vmem:[#allocation9 + $0x648] sm:$0xff]
    %v322 = vld [vmem:[#allocation9 + $0x650] sm:$0xff]
    %v323 = vld [vmem:[#allocation9 + $0x658] sm:$0xff]
    %v324 = vld [vmem:[#allocation9 + $0x660] sm:$0xff]
    %v325 = vld [vmem:[#allocation9 + $0x668] sm:$0xff]
    %v326 = vld [vmem:[#allocation9 + $0x670] sm:$0xff]
    %v327 = vld [vmem:[#allocation9 + $0x678] sm:$0xff]
    %v328 = vld [vmem:[#allocation9 + $0x680] sm:$0xff]
    %v329 = vld [vmem:[#allocation9 + $0x688] sm:$0xff]
    %v330 = vld [vmem:[#allocation9 + $0x690] sm:$0xff]
    %v331 = vld [vmem:[#allocation9 + $0x698] sm:$0xff]
    %v332 = vld [vmem:[#allocation9 + $0x6a0] sm:$0xff]
    %v333 = vld [vmem:[#allocation9 + $0x6a8] sm:$0xff]
    %v334 = vld [vmem:[#allocation9 + $0x6b0] sm:$0xff]
    %v335 = vld [vmem:[#allocation9 + $0x6b8] sm:$0xff]
    %v336 = vld [vmem:[#allocation9 + $0x6c0] sm:$0xff]
    %v337 = vld [vmem:[#allocation9 + $0x6c8] sm:$0xff]
    %v338 = vld [vmem:[#allocation9 + $0x6d0] sm:$0xff]
    %v339 = vld [vmem:[#allocation9 + $0x6d8] sm:$0xff]
    %v340 = vld [vmem:[#allocation9 + $0x6e0] sm:$0xff]
    %v341 = vld [vmem:[#allocation9 + $0x6e8] sm:$0xff]
    %v342 = vld [vmem:[#allocation9 + $0x6f0] sm:$0xff]
    %v343 = vld [vmem:[#allocation9 + $0x6f8] sm:$0xff]
    %v344 = vld [vmem:[#allocation9 + $0x700] sm:$0xff]
    %v345 = vld [vmem:[#allocation9 + $0x708] sm:$0xff]
    %v346 = vld [vmem:[#allocation9 + $0x710] sm:$0xff]
    %v347 = vld [vmem:[#allocation9 + $0x718] sm:$0xff]
    %v348 = vld [vmem:[#allocation9 + $0x720] sm:$0xff]
    %v349 = vld [vmem:[#allocation9 + $0x728] sm:$0xff]
    %v350 = vld [vmem:[#allocation9 + $0x730] sm:$0xff]
    %v351 = vld [vmem:[#allocation9 + $0x738] sm:$0xff]
    %v352 = vld [vmem:[#allocation9 + $0x740] sm:$0xff]
    %v353 = vld [vmem:[#allocation9 + $0x748] sm:$0xff]
    %v354 = vld [vmem:[#allocation9 + $0x750] sm:$0xff]
    %v355 = vld [vmem:[#allocation9 + $0x758] sm:$0xff]
    %v356 = vld [vmem:[#allocation9 + $0x760] sm:$0xff]
    %v357 = vld [vmem:[#allocation9 + $0x768] sm:$0xff]
    %v358 = vld [vmem:[#allocation9 + $0x770] sm:$0xff]
    %v359 = vld [vmem:[#allocation9 + $0x778] sm:$0xff]
    %v360 = vld [vmem:[#allocation9 + $0x780] sm:$0xff]
    %v361 = vld [vmem:[#allocation9 + $0x788] sm:$0xff]
    %v362 = vld [vmem:[#allocation9 + $0x790] sm:$0xff]
    %v363 = vld [vmem:[#allocation9 + $0x798] sm:$0xff]
    %v364 = vld [vmem:[#allocation9 + $0x7a0] sm:$0xff]
    %v365 = vld [vmem:[#allocation9 + $0x7a8] sm:$0xff]
    %v366 = vld [vmem:[#allocation9 + $0x7b0] sm:$0xff]
    %v367 = vld [vmem:[#allocation9 + $0x7b8] sm:$0xff]
    %v368 = vld [vmem:[#allocation9 + $0x7c0] sm:$0xff]
    %v369 = vld [vmem:[#allocation9 + $0x7c8] sm:$0xff]
    %v370 = vld [vmem:[#allocation9 + $0x7d0] sm:$0xff]
    %v371 = vld [vmem:[#allocation9 + $0x7d8] sm:$0xff]
    %v372 = vld [vmem:[#allocation9 + $0x7e0] sm:$0xff]
    %v373 = vld [vmem:[#allocation9 + $0x7e8] sm:$0xff]
    %v374 = vld [vmem:[#allocation9 + $0x7f0] sm:$0xff]
    %v375 = vld [vmem:[#allocation9 + $0x7f8] sm:$0xff]
    %v376 = vld [vmem:[#allocation9 + $0x800] sm:$0xff]
    %v377 = vld [vmem:[#allocation9 + $0x808] sm:$0xff]
    %v378 = vld [vmem:[#allocation9 + $0x810] sm:$0xff]
    %v379 = vld [vmem:[#allocation9 + $0x818] sm:$0xff]
    %v380 = vld [vmem:[#allocation9 + $0x820] sm:$0xff]
    %v381 = vld [vmem:[#allocation9 + $0x828] sm:$0xff]
    %v382 = vld [vmem:[#allocation9 + $0x830] sm:$0xff]
    %v383 = vld [vmem:[#allocation9 + $0x838] sm:$0xff]
    %v384 = vld [vmem:[#allocation9 + $0x840] sm:$0xff]
    %v385 = vld [vmem:[#allocation9 + $0x848] sm:$0xff]
    %v386 = vld [vmem:[#allocation9 + $0x850] sm:$0xff]
    %v387 = vld [vmem:[#allocation9 + $0x858] sm:$0xff]
    %v388 = vld [vmem:[#allocation9 + $0x860] sm:$0xff]
    %v389 = vld [vmem:[#allocation9 + $0x868] sm:$0xff]
    %v390 = vld [vmem:[#allocation9 + $0x870] sm:$0xff]
    %v391 = vld [vmem:[#allocation9 + $0x878] sm:$0xff]
    %v392 = vld [vmem:[#allocation9 + $0x880] sm:$0xff]
    %v393 = vld [vmem:[#allocation9 + $0x888] sm:$0xff]
    %v394 = vld [vmem:[#allocation9 + $0x890] sm:$0xff]
    %v395 = vld [vmem:[#allocation9 + $0x898] sm:$0xff]
    %v396 = vld [vmem:[#allocation9 + $0x8a0] sm:$0xff]
    %v397 = vld [vmem:[#allocation9 + $0x8a8] sm:$0xff]
    %v398 = vld [vmem:[#allocation9 + $0x8b0] sm:$0xff]
    %v399 = vld [vmem:[#allocation9 + $0x8b8] sm:$0xff]
    %v400 = vld [vmem:[#allocation9 + $0x8c0] sm:$0xff]
    %v401 = vld [vmem:[#allocation9 + $0x8c8] sm:$0xff]
    %v402 = vld [vmem:[#allocation9 + $0x8d0] sm:$0xff]
    %v403 = vld [vmem:[#allocation9 + $0x8d8] sm:$0xff]
    %v404 = vld [vmem:[#allocation9 + $0x8e0] sm:$0xff]
    %v405 = vld [vmem:[#allocation9 + $0x8e8] sm:$0xff]
    %v406 = vld [vmem:[#allocation9 + $0x8f0] sm:$0xff]
    %v407 = vld [vmem:[#allocation9 + $0x8f8] sm:$0xff]
    %v408 = vpack.c.bf16 %v102, %v96
    %v409 = vpack.c.bf16 %v103, %v97
    %v410 = vpack.c.bf16 %v104, %v98
    %v411 = vpack.c.bf16 %v105, %v99
    %v412 = vpack.c.bf16 %v106, %v100
    %v413 = vpack.c.bf16 %v107, %v101
    %v414 = vpack.c.bf16 %v114, %v108
    %v415 = vpack.c.bf16 %v115, %v109
    %v416 = vpack.c.bf16 %v116, %v110
    %v417 = vpack.c.bf16 %v117, %v111
    %v418 = vpack.c.bf16 %v118, %v112
    %v419 = vpack.c.bf16 %v119, %v113
    %v420 = vld [vmem:[#allocation10] ss:$8 sm:$0xf]
    %v421 = vld [vmem:[#allocation10] ss:$8 sm:$0x30]
    %v422 = vor.u32 %v420, %v421
    %v424 = vlaneseq
    %v425 = vshrl.u32 %v424, 7
    %v426 = vsub.s32 0, %v425
    %v427 = vrot.slane %v422, %v426
    %v428 = vlaneseq
    %v429 = vshrl.u32 %v428, 7
    %v430 = vsub.s32 1, %v429
    %v431 = vrot.slane %v422, %v430
    %v432 = vlaneseq
    %v433 = vshrl.u32 %v432, 7
    %v434 = vsub.s32 2, %v433
    %v435 = vrot.slane %v422, %v434
    %v436 = vlaneseq
    %v437 = vshrl.u32 %v436, 7
    %v438 = vsub.s32 3, %v437
    %v439 = vrot.slane %v422, %v438
    %v440 = vlaneseq
    %v441 = vshrl.u32 %v440, 7
    %v442 = vsub.s32 4, %v441
    %v443 = vrot.slane %v422, %v442
    %v444 = vlaneseq
    %v445 = vshrl.u32 %v444, 7
    %v446 = vsub.s32 5, %v445
    %v447 = vrot.slane %v422, %v446
    %v742 = vunpack.c.l.b16 %v120
    %v743 = vunpack.c.h.b16 %v120
    %v744 = vunpack.c.l.b16 %v121
    %v745 = vunpack.c.h.b16 %v121
    %v746 = vunpack.c.l.b16 %v122
    %v747 = vunpack.c.h.b16 %v122
    %v748 = vunpack.c.l.b16 %v123
    %v749 = vunpack.c.h.b16 %v123
    %v750 = vunpack.c.l.b16 %v124
    %v751 = vunpack.c.h.b16 %v124
    %v752 = vunpack.c.l.b16 %v125
    %v753 = vunpack.c.h.b16 %v125
    %v754 = vunpack.c.l.b16 %v126
    %v755 = vunpack.c.h.b16 %v126
    %v756 = vunpack.c.l.b16 %v127
    %v757 = vunpack.c.h.b16 %v127
    %v758 = vunpack.c.l.b16 %v128
    %v759 = vunpack.c.h.b16 %v128
    %v760 = vunpack.c.l.b16 %v129
    %v761 = vunpack.c.h.b16 %v129
    %v762 = vunpack.c.l.b16 %v130
    %v763 = vunpack.c.h.b16 %v130
    %v764 = vunpack.c.l.b16 %v131
    %v765 = vunpack.c.h.b16 %v131
    %v766 = vunpack.c.l.b16 %v132
    %v767 = vunpack.c.h.b16 %v132
    %v768 = vunpack.c.l.b16 %v133
    %v769 = vunpack.c.h.b16 %v133
    %v770 = vunpack.c.l.b16 %v134
    %v771 = vunpack.c.h.b16 %v134
    %v772 = vunpack.c.l.b16 %v135
    %v773 = vunpack.c.h.b16 %v135
    %v774 = vunpack.c.l.b16 %v136
    %v775 = vunpack.c.h.b16 %v136
    %v776 = vunpack.c.l.b16 %v137
    %v777 = vunpack.c.h.b16 %v137
    %v778 = vunpack.c.l.b16 %v138
    %v779 = vunpack.c.h.b16 %v138
    %v780 = vunpack.c.l.b16 %v139
    %v781 = vunpack.c.h.b16 %v139
    %v782 = vunpack.c.l.b16 %v140
    %v783 = vunpack.c.h.b16 %v140
    %v784 = vunpack.c.l.b16 %v141
    %v785 = vunpack.c.h.b16 %v141
    %v786 = vunpack.c.l.b16 %v142
    %v787 = vunpack.c.h.b16 %v142
    %v788 = vunpack.c.l.b16 %v143
    %v789 = vunpack.c.h.b16 %v143
    %v790 = vunpack.c.l.b16 %v144
    %v791 = vunpack.c.h.b16 %v144
    %v792 = vunpack.c.l.b16 %v145
    %v793 = vunpack.c.h.b16 %v145
    %v794 = vunpack.c.l.b16 %v146
    %v795 = vunpack.c.h.b16 %v146
    %v796 = vunpack.c.l.b16 %v147
    %v797 = vunpack.c.h.b16 %v147
    %v798 = vunpack.c.l.b16 %v148
    %v799 = vunpack.c.h.b16 %v148
    %v800 = vunpack.c.l.b16 %v149
    %v801 = vunpack.c.h.b16 %v149
    %v802 = vunpack.c.l.b16 %v150
    %v803 = vunpack.c.h.b16 %v150
    %v804 = vunpack.c.l.b16 %v151
    %v805 = vunpack.c.h.b16 %v151
    %v806 = vunpack.c.l.b16 %v152
    %v807 = vunpack.c.h.b16 %v152
    %v808 = vunpack.c.l.b16 %v153
    %v809 = vunpack.c.h.b16 %v153
    %v810 = vunpack.c.l.b16 %v154
    %v811 = vunpack.c.h.b16 %v154
    %v812 = vunpack.c.l.b16 %v155
    %v813 = vunpack.c.h.b16 %v155
    %v814 = vunpack.c.l.b16 %v156
    %v815 = vunpack.c.h.b16 %v156
    %v816 = vunpack.c.l.b16 %v157
    %v817 = vunpack.c.h.b16 %v157
    %v818 = vunpack.c.l.b16 %v158
    %v819 = vunpack.c.h.b16 %v158
    %v820 = vunpack.c.l.b16 %v159
    %v821 = vunpack.c.h.b16 %v159
    %v822 = vunpack.c.l.b16 %v160
    %v823 = vunpack.c.h.b16 %v160
    %v824 = vunpack.c.l.b16 %v161
    %v825 = vunpack.c.h.b16 %v161
    %v826 = vunpack.c.l.b16 %v162
    %v827 = vunpack.c.h.b16 %v162
    %v828 = vunpack.c.l.b16 %v163
    %v829 = vunpack.c.h.b16 %v163
    %v830 = vunpack.c.l.b16 %v164
    %v831 = vunpack.c.h.b16 %v164
    %v832 = vunpack.c.l.b16 %v165
    %v833 = vunpack.c.h.b16 %v165
    %v834 = vunpack.c.l.b16 %v166
    %v835 = vunpack.c.h.b16 %v166
    %v836 = vunpack.c.l.b16 %v167
    %v837 = vunpack.c.h.b16 %v167
    %v838 = vunpack.c.l.b16 %v168
    %v839 = vunpack.c.h.b16 %v168
    %v840 = vunpack.c.l.b16 %v169
    %v841 = vunpack.c.h.b16 %v169
    %v842 = vunpack.c.l.b16 %v170
    %v843 = vunpack.c.h.b16 %v170
    %v844 = vunpack.c.l.b16 %v171
    %v845 = vunpack.c.h.b16 %v171
    %v846 = vunpack.c.l.b16 %v172
    %v847 = vunpack.c.h.b16 %v172
    %v848 = vunpack.c.l.b16 %v173
    %v849 = vunpack.c.h.b16 %v173
    %v850 = vunpack.c.l.b16 %v174
    %v851 = vunpack.c.h.b16 %v174
    %v852 = vunpack.c.l.b16 %v175
    %v853 = vunpack.c.h.b16 %v175
    %v854 = vunpack.c.l.b16 %v176
    %v855 = vunpack.c.h.b16 %v176
    %v856 = vunpack.c.l.b16 %v177
    %v857 = vunpack.c.h.b16 %v177
    %v858 = vunpack.c.l.b16 %v178
    %v859 = vunpack.c.h.b16 %v178
    %v860 = vunpack.c.l.b16 %v179
    %v861 = vunpack.c.h.b16 %v179
    %v862 = vunpack.c.l.b16 %v180
    %v863 = vunpack.c.h.b16 %v180
    %v864 = vunpack.c.l.b16 %v181
    %v865 = vunpack.c.h.b16 %v181
    %v866 = vunpack.c.l.b16 %v182
    %v867 = vunpack.c.h.b16 %v182
    %v868 = vunpack.c.l.b16 %v183
    %v869 = vunpack.c.h.b16 %v183
    %v870 = vunpack.c.l.b16 %v184
    %v871 = vunpack.c.h.b16 %v184
    %v872 = vunpack.c.l.b16 %v185
    %v873 = vunpack.c.h.b16 %v185
    %v874 = vunpack.c.l.b16 %v186
    %v875 = vunpack.c.h.b16 %v186
    %v876 = vunpack.c.l.b16 %v187
    %v877 = vunpack.c.h.b16 %v187
    %v878 = vunpack.c.l.b16 %v188
    %v879 = vunpack.c.h.b16 %v188
    %v880 = vunpack.c.l.b16 %v189
    %v881 = vunpack.c.h.b16 %v189
    %v882 = vunpack.c.l.b16 %v190
    %v883 = vunpack.c.h.b16 %v190
    %v884 = vunpack.c.l.b16 %v191
    %v885 = vunpack.c.h.b16 %v191
    %v886 = vunpack.c.l.b16 %v192
    %v887 = vunpack.c.h.b16 %v192
    %v888 = vunpack.c.l.b16 %v193
    %v889 = vunpack.c.h.b16 %v193
    %v890 = vunpack.c.l.b16 %v194
    %v891 = vunpack.c.h.b16 %v194
    %v892 = vunpack.c.l.b16 %v195
    %v893 = vunpack.c.h.b16 %v195
    %v894 = vunpack.c.l.b16 %v196
    %v895 = vunpack.c.h.b16 %v196
    %v896 = vunpack.c.l.b16 %v197
    %v897 = vunpack.c.h.b16 %v197
    %v898 = vunpack.c.l.b16 %v198
    %v899 = vunpack.c.h.b16 %v198
    %v900 = vunpack.c.l.b16 %v199
    %v901 = vunpack.c.h.b16 %v199
    %v902 = vunpack.c.l.b16 %v200
    %v903 = vunpack.c.h.b16 %v200
    %v904 = vunpack.c.l.b16 %v201
    %v905 = vunpack.c.h.b16 %v201
    %v906 = vunpack.c.l.b16 %v202
    %v907 = vunpack.c.h.b16 %v202
    %v908 = vunpack.c.l.b16 %v203
    %v909 = vunpack.c.h.b16 %v203
    %v910 = vunpack.c.l.b16 %v204
    %v911 = vunpack.c.h.b16 %v204
    %v912 = vunpack.c.l.b16 %v205
    %v913 = vunpack.c.h.b16 %v205
    %v914 = vunpack.c.l.b16 %v206
    %v915 = vunpack.c.h.b16 %v206
    %v916 = vunpack.c.l.b16 %v207
    %v917 = vunpack.c.h.b16 %v207
    %v918 = vunpack.c.l.b16 %v208
    %v919 = vunpack.c.h.b16 %v208
    %v920 = vunpack.c.l.b16 %v209
    %v921 = vunpack.c.h.b16 %v209
    %v922 = vunpack.c.l.b16 %v210
    %v923 = vunpack.c.h.b16 %v210
    %v924 = vunpack.c.l.b16 %v211
    %v925 = vunpack.c.h.b16 %v211
    %v926 = vunpack.c.l.b16 %v212
    %v927 = vunpack.c.h.b16 %v212
    %v928 = vunpack.c.l.b16 %v213
    %v929 = vunpack.c.h.b16 %v213
    %v930 = vunpack.c.l.b16 %v214
    %v931 = vunpack.c.h.b16 %v214
    %v932 = vunpack.c.l.b16 %v215
    %v933 = vunpack.c.h.b16 %v215
    %v934 = vunpack.c.l.b16 %v216
    %v935 = vunpack.c.h.b16 %v216
    %v936 = vunpack.c.l.b16 %v217
    %v937 = vunpack.c.h.b16 %v217
    %v938 = vunpack.c.l.b16 %v218
    %v939 = vunpack.c.h.b16 %v218
    %v940 = vunpack.c.l.b16 %v219
    %v941 = vunpack.c.h.b16 %v219
    %v942 = vunpack.c.l.b16 %v220
    %v943 = vunpack.c.h.b16 %v220
    %v944 = vunpack.c.l.b16 %v221
    %v945 = vunpack.c.h.b16 %v221
    %v946 = vunpack.c.l.b16 %v222
    %v947 = vunpack.c.h.b16 %v222
    %v948 = vunpack.c.l.b16 %v223
    %v949 = vunpack.c.h.b16 %v223
    %v950 = vunpack.c.l.b16 %v224
    %v951 = vunpack.c.h.b16 %v224
    %v952 = vunpack.c.l.b16 %v225
    %v953 = vunpack.c.h.b16 %v225
    %v954 = vunpack.c.l.b16 %v226
    %v955 = vunpack.c.h.b16 %v226
    %v956 = vunpack.c.l.b16 %v227
    %v957 = vunpack.c.h.b16 %v227
    %v958 = vunpack.c.l.b16 %v228
    %v959 = vunpack.c.h.b16 %v228
    %v960 = vunpack.c.l.b16 %v229
    %v961 = vunpack.c.h.b16 %v229
    %v962 = vunpack.c.l.b16 %v230
    %v963 = vunpack.c.h.b16 %v230
    %v964 = vunpack.c.l.b16 %v231
    %v965 = vunpack.c.h.b16 %v231
    %v966 = vunpack.c.l.b16 %v232
    %v967 = vunpack.c.h.b16 %v232
    %v968 = vunpack.c.l.b16 %v233
    %v969 = vunpack.c.h.b16 %v233
    %v970 = vunpack.c.l.b16 %v234
    %v971 = vunpack.c.h.b16 %v234
    %v972 = vunpack.c.l.b16 %v235
    %v973 = vunpack.c.h.b16 %v235
    %v974 = vunpack.c.l.b16 %v236
    %v975 = vunpack.c.h.b16 %v236
    %v976 = vunpack.c.l.b16 %v237
    %v977 = vunpack.c.h.b16 %v237
    %v978 = vunpack.c.l.b16 %v238
    %v979 = vunpack.c.h.b16 %v238
    %v980 = vunpack.c.l.b16 %v239
    %v981 = vunpack.c.h.b16 %v239
    %v982 = vunpack.c.l.b16 %v240
    %v983 = vunpack.c.h.b16 %v240
    %v984 = vunpack.c.l.b16 %v241
    %v985 = vunpack.c.h.b16 %v241
    %v986 = vunpack.c.l.b16 %v242
    %v987 = vunpack.c.h.b16 %v242
    %v988 = vunpack.c.l.b16 %v243
    %v989 = vunpack.c.h.b16 %v243
    %v990 = vunpack.c.l.b16 %v244
    %v991 = vunpack.c.h.b16 %v244
    %v992 = vunpack.c.l.b16 %v245
    %v993 = vunpack.c.h.b16 %v245
    %v994 = vunpack.c.l.b16 %v246
    %v995 = vunpack.c.h.b16 %v246
    %v996 = vunpack.c.l.b16 %v247
    %v997 = vunpack.c.h.b16 %v247
    %v998 = vunpack.c.l.b16 %v248
    %v999 = vunpack.c.h.b16 %v248
    %v1000 = vunpack.c.l.b16 %v249
    %v1001 = vunpack.c.h.b16 %v249
    %v1002 = vunpack.c.l.b16 %v250
    %v1003 = vunpack.c.h.b16 %v250
    %v1004 = vunpack.c.l.b16 %v251
    %v1005 = vunpack.c.h.b16 %v251
    %v1006 = vunpack.c.l.b16 %v252
    %v1007 = vunpack.c.h.b16 %v252
    %v1008 = vunpack.c.l.b16 %v253
    %v1009 = vunpack.c.h.b16 %v253
    %v1010 = vunpack.c.l.b16 %v254
    %v1011 = vunpack.c.h.b16 %v254
    %v1012 = vunpack.c.l.b16 %v255
    %v1013 = vunpack.c.h.b16 %v255
    %v1014 = vunpack.c.l.b16 %v256
    %v1015 = vunpack.c.h.b16 %v256
    %v1016 = vunpack.c.l.b16 %v257
    %v1017 = vunpack.c.h.b16 %v257
    %v1018 = vunpack.c.l.b16 %v258
    %v1019 = vunpack.c.h.b16 %v258
    %v1020 = vunpack.c.l.b16 %v259
    %v1021 = vunpack.c.h.b16 %v259
    %v1022 = vunpack.c.l.b16 %v260
    %v1023 = vunpack.c.h.b16 %v260
    %v1024 = vunpack.c.l.b16 %v261
    %v1025 = vunpack.c.h.b16 %v261
    %v1026 = vunpack.c.l.b16 %v262
    %v1027 = vunpack.c.h.b16 %v262
    %v1028 = vunpack.c.l.b16 %v263
    %v1029 = vunpack.c.h.b16 %v263
    %v1030 = vunpack.c.l.b16 %v264
    %v1031 = vunpack.c.h.b16 %v264
    %v1032 = vunpack.c.l.b16 %v265
    %v1033 = vunpack.c.h.b16 %v265
    %v1034 = vunpack.c.l.b16 %v266
    %v1035 = vunpack.c.h.b16 %v266
    %v1036 = vunpack.c.l.b16 %v267
    %v1037 = vunpack.c.h.b16 %v267
    %v1038 = vunpack.c.l.b16 %v268
    %v1039 = vunpack.c.h.b16 %v268
    %v1040 = vunpack.c.l.b16 %v269
    %v1041 = vunpack.c.h.b16 %v269
    %v1042 = vunpack.c.l.b16 %v270
    %v1043 = vunpack.c.h.b16 %v270
    %v1044 = vunpack.c.l.b16 %v271
    %v1045 = vunpack.c.h.b16 %v271
    %v1046 = vunpack.c.l.b16 %v272
    %v1047 = vunpack.c.h.b16 %v272
    %v1048 = vunpack.c.l.b16 %v273
    %v1049 = vunpack.c.h.b16 %v273
    %v1050 = vunpack.c.l.b16 %v274
    %v1051 = vunpack.c.h.b16 %v274
    %v1052 = vunpack.c.l.b16 %v275
    %v1053 = vunpack.c.h.b16 %v275
    %v1054 = vunpack.c.l.b16 %v276
    %v1055 = vunpack.c.h.b16 %v276
    %v1056 = vunpack.c.l.b16 %v277
    %v1057 = vunpack.c.h.b16 %v277
    %v1058 = vunpack.c.l.b16 %v278
    %v1059 = vunpack.c.h.b16 %v278
    %v1060 = vunpack.c.l.b16 %v279
    %v1061 = vunpack.c.h.b16 %v279
    %v1062 = vunpack.c.l.b16 %v280
    %v1063 = vunpack.c.h.b16 %v280
    %v1064 = vunpack.c.l.b16 %v281
    %v1065 = vunpack.c.h.b16 %v281
    %v1066 = vunpack.c.l.b16 %v282
    %v1067 = vunpack.c.h.b16 %v282
    %v1068 = vunpack.c.l.b16 %v283
    %v1069 = vunpack.c.h.b16 %v283
    %v1070 = vunpack.c.l.b16 %v284
    %v1071 = vunpack.c.h.b16 %v284
    %v1072 = vunpack.c.l.b16 %v285
    %v1073 = vunpack.c.h.b16 %v285
    %v1074 = vunpack.c.l.b16 %v286
    %v1075 = vunpack.c.h.b16 %v286
    %v1076 = vunpack.c.l.b16 %v287
    %v1077 = vunpack.c.h.b16 %v287
    %v1078 = vunpack.c.l.b16 %v288
    %v1079 = vunpack.c.h.b16 %v288
    %v1080 = vunpack.c.l.b16 %v289
    %v1081 = vunpack.c.h.b16 %v289
    %v1082 = vunpack.c.l.b16 %v290
    %v1083 = vunpack.c.h.b16 %v290
    %v1084 = vunpack.c.l.b16 %v291
    %v1085 = vunpack.c.h.b16 %v291
    %v1086 = vunpack.c.l.b16 %v292
    %v1087 = vunpack.c.h.b16 %v292
    %v1088 = vunpack.c.l.b16 %v293
    %v1089 = vunpack.c.h.b16 %v293
    %v1090 = vunpack.c.l.b16 %v294
    %v1091 = vunpack.c.h.b16 %v294
    %v1092 = vunpack.c.l.b16 %v295
    %v1093 = vunpack.c.h.b16 %v295
    %v1094 = vunpack.c.l.b16 %v296
    %v1095 = vunpack.c.h.b16 %v296
    %v1096 = vunpack.c.l.b16 %v297
    %v1097 = vunpack.c.h.b16 %v297
    %v1098 = vunpack.c.l.b16 %v298
    %v1099 = vunpack.c.h.b16 %v298
    %v1100 = vunpack.c.l.b16 %v299
    %v1101 = vunpack.c.h.b16 %v299
    %v1102 = vunpack.c.l.b16 %v300
    %v1103 = vunpack.c.h.b16 %v300
    %v1104 = vunpack.c.l.b16 %v301
    %v1105 = vunpack.c.h.b16 %v301
    %v1106 = vunpack.c.l.b16 %v302
    %v1107 = vunpack.c.h.b16 %v302
    %v1108 = vunpack.c.l.b16 %v303
    %v1109 = vunpack.c.h.b16 %v303
    %v1110 = vunpack.c.l.b16 %v304
    %v1111 = vunpack.c.h.b16 %v304
    %v1112 = vunpack.c.l.b16 %v305
    %v1113 = vunpack.c.h.b16 %v305
    %v1114 = vunpack.c.l.b16 %v306
    %v1115 = vunpack.c.h.b16 %v306
    %v1116 = vunpack.c.l.b16 %v307
    %v1117 = vunpack.c.h.b16 %v307
    %v1118 = vunpack.c.l.b16 %v308
    %v1119 = vunpack.c.h.b16 %v308
    %v1120 = vunpack.c.l.b16 %v309
    %v1121 = vunpack.c.h.b16 %v309
    %v1122 = vunpack.c.l.b16 %v310
    %v1123 = vunpack.c.h.b16 %v310
    %v1124 = vunpack.c.l.b16 %v311
    %v1125 = vunpack.c.h.b16 %v311
    %v1126 = vunpack.c.l.b16 %v312
    %v1127 = vunpack.c.h.b16 %v312
    %v1128 = vunpack.c.l.b16 %v313
    %v1129 = vunpack.c.h.b16 %v313
    %v1130 = vunpack.c.l.b16 %v314
    %v1131 = vunpack.c.h.b16 %v314
    %v1132 = vunpack.c.l.b16 %v315
    %v1133 = vunpack.c.h.b16 %v315
    %v1134 = vunpack.c.l.b16 %v316
    %v1135 = vunpack.c.h.b16 %v316
    %v1136 = vunpack.c.l.b16 %v317
    %v1137 = vunpack.c.h.b16 %v317
    %v1138 = vunpack.c.l.b16 %v318
    %v1139 = vunpack.c.h.b16 %v318
    %v1140 = vunpack.c.l.b16 %v319
    %v1141 = vunpack.c.h.b16 %v319
    %v1142 = vunpack.c.l.b16 %v320
    %v1143 = vunpack.c.h.b16 %v320
    %v1144 = vunpack.c.l.b16 %v321
    %v1145 = vunpack.c.h.b16 %v321
    %v1146 = vunpack.c.l.b16 %v322
    %v1147 = vunpack.c.h.b16 %v322
    %v1148 = vunpack.c.l.b16 %v323
    %v1149 = vunpack.c.h.b16 %v323
    %v1150 = vunpack.c.l.b16 %v324
    %v1151 = vunpack.c.h.b16 %v324
    %v1152 = vunpack.c.l.b16 %v325
    %v1153 = vunpack.c.h.b16 %v325
    %v1154 = vunpack.c.l.b16 %v326
    %v1155 = vunpack.c.h.b16 %v326
    %v1156 = vunpack.c.l.b16 %v327
    %v1157 = vunpack.c.h.b16 %v327
    %v1158 = vunpack.c.l.b16 %v328
    %v1159 = vunpack.c.h.b16 %v328
    %v1160 = vunpack.c.l.b16 %v329
    %v1161 = vunpack.c.h.b16 %v329
    %v1162 = vunpack.c.l.b16 %v330
    %v1163 = vunpack.c.h.b16 %v330
    %v1164 = vunpack.c.l.b16 %v331
    %v1165 = vunpack.c.h.b16 %v331
    %v1166 = vunpack.c.l.b16 %v332
    %v1167 = vunpack.c.h.b16 %v332
    %v1168 = vunpack.c.l.b16 %v333
    %v1169 = vunpack.c.h.b16 %v333
    %v1170 = vunpack.c.l.b16 %v334
    %v1171 = vunpack.c.h.b16 %v334
    %v1172 = vunpack.c.l.b16 %v335
    %v1173 = vunpack.c.h.b16 %v335
    %v1174 = vunpack.c.l.b16 %v336
    %v1175 = vunpack.c.h.b16 %v336
    %v1176 = vunpack.c.l.b16 %v337
    %v1177 = vunpack.c.h.b16 %v337
    %v1178 = vunpack.c.l.b16 %v338
    %v1179 = vunpack.c.h.b16 %v338
    %v1180 = vunpack.c.l.b16 %v339
    %v1181 = vunpack.c.h.b16 %v339
    %v1182 = vunpack.c.l.b16 %v340
    %v1183 = vunpack.c.h.b16 %v340
    %v1184 = vunpack.c.l.b16 %v341
    %v1185 = vunpack.c.h.b16 %v341
    %v1186 = vunpack.c.l.b16 %v342
    %v1187 = vunpack.c.h.b16 %v342
    %v1188 = vunpack.c.l.b16 %v343
    %v1189 = vunpack.c.h.b16 %v343
    %v1190 = vunpack.c.l.b16 %v344
    %v1191 = vunpack.c.h.b16 %v344
    %v1192 = vunpack.c.l.b16 %v345
    %v1193 = vunpack.c.h.b16 %v345
    %v1194 = vunpack.c.l.b16 %v346
    %v1195 = vunpack.c.h.b16 %v346
    %v1196 = vunpack.c.l.b16 %v347
    %v1197 = vunpack.c.h.b16 %v347
    %v1198 = vunpack.c.l.b16 %v348
    %v1199 = vunpack.c.h.b16 %v348
    %v1200 = vunpack.c.l.b16 %v349
    %v1201 = vunpack.c.h.b16 %v349
    %v1202 = vunpack.c.l.b16 %v350
    %v1203 = vunpack.c.h.b16 %v350
    %v1204 = vunpack.c.l.b16 %v351
    %v1205 = vunpack.c.h.b16 %v351
    %v1206 = vunpack.c.l.b16 %v352
    %v1207 = vunpack.c.h.b16 %v352
    %v1208 = vunpack.c.l.b16 %v353
    %v1209 = vunpack.c.h.b16 %v353
    %v1210 = vunpack.c.l.b16 %v354
    %v1211 = vunpack.c.h.b16 %v354
    %v1212 = vunpack.c.l.b16 %v355
    %v1213 = vunpack.c.h.b16 %v355
    %v1214 = vunpack.c.l.b16 %v356
    %v1215 = vunpack.c.h.b16 %v356
    %v1216 = vunpack.c.l.b16 %v357
    %v1217 = vunpack.c.h.b16 %v357
    %v1218 = vunpack.c.l.b16 %v358
    %v1219 = vunpack.c.h.b16 %v358
    %v1220 = vunpack.c.l.b16 %v359
    %v1221 = vunpack.c.h.b16 %v359
    %v1222 = vunpack.c.l.b16 %v360
    %v1223 = vunpack.c.h.b16 %v360
    %v1224 = vunpack.c.l.b16 %v361
    %v1225 = vunpack.c.h.b16 %v361
    %v1226 = vunpack.c.l.b16 %v362
    %v1227 = vunpack.c.h.b16 %v362
    %v1228 = vunpack.c.l.b16 %v363
    %v1229 = vunpack.c.h.b16 %v363
    %v1230 = vunpack.c.l.b16 %v364
    %v1231 = vunpack.c.h.b16 %v364
    %v1232 = vunpack.c.l.b16 %v365
    %v1233 = vunpack.c.h.b16 %v365
    %v1234 = vunpack.c.l.b16 %v366
    %v1235 = vunpack.c.h.b16 %v366
    %v1236 = vunpack.c.l.b16 %v367
    %v1237 = vunpack.c.h.b16 %v367
    %v1238 = vunpack.c.l.b16 %v368
    %v1239 = vunpack.c.h.b16 %v368
    %v1240 = vunpack.c.l.b16 %v369
    %v1241 = vunpack.c.h.b16 %v369
    %v1242 = vunpack.c.l.b16 %v370
    %v1243 = vunpack.c.h.b16 %v370
    %v1244 = vunpack.c.l.b16 %v371
    %v1245 = vunpack.c.h.b16 %v371
    %v1246 = vunpack.c.l.b16 %v372
    %v1247 = vunpack.c.h.b16 %v372
    %v1248 = vunpack.c.l.b16 %v373
    %v1249 = vunpack.c.h.b16 %v373
    %v1250 = vunpack.c.l.b16 %v374
    %v1251 = vunpack.c.h.b16 %v374
    %v1252 = vunpack.c.l.b16 %v375
    %v1253 = vunpack.c.h.b16 %v375
    %v1254 = vunpack.c.l.b16 %v376
    %v1255 = vunpack.c.h.b16 %v376
    %v1256 = vunpack.c.l.b16 %v377
    %v1257 = vunpack.c.h.b16 %v377
    %v1258 = vunpack.c.l.b16 %v378
    %v1259 = vunpack.c.h.b16 %v378
    %v1260 = vunpack.c.l.b16 %v379
    %v1261 = vunpack.c.h.b16 %v379
    %v1262 = vunpack.c.l.b16 %v380
    %v1263 = vunpack.c.h.b16 %v380
    %v1264 = vunpack.c.l.b16 %v381
    %v1265 = vunpack.c.h.b16 %v381
    %v1266 = vunpack.c.l.b16 %v382
    %v1267 = vunpack.c.h.b16 %v382
    %v1268 = vunpack.c.l.b16 %v383
    %v1269 = vunpack.c.h.b16 %v383
    %v1270 = vunpack.c.l.b16 %v384
    %v1271 = vunpack.c.h.b16 %v384
    %v1272 = vunpack.c.l.b16 %v385
    %v1273 = vunpack.c.h.b16 %v385
    %v1274 = vunpack.c.l.b16 %v386
    %v1275 = vunpack.c.h.b16 %v386
    %v1276 = vunpack.c.l.b16 %v387
    %v1277 = vunpack.c.h.b16 %v387
    %v1278 = vunpack.c.l.b16 %v388
    %v1279 = vunpack.c.h.b16 %v388
    %v1280 = vunpack.c.l.b16 %v389
    %v1281 = vunpack.c.h.b16 %v389
    %v1282 = vunpack.c.l.b16 %v390
    %v1283 = vunpack.c.h.b16 %v390
    %v1284 = vunpack.c.l.b16 %v391
    %v1285 = vunpack.c.h.b16 %v391
    %v1286 = vunpack.c.l.b16 %v392
    %v1287 = vunpack.c.h.b16 %v392
    %v1288 = vunpack.c.l.b16 %v393
    %v1289 = vunpack.c.h.b16 %v393
    %v1290 = vunpack.c.l.b16 %v394
    %v1291 = vunpack.c.h.b16 %v394
    %v1292 = vunpack.c.l.b16 %v395
    %v1293 = vunpack.c.h.b16 %v395
    %v1294 = vunpack.c.l.b16 %v396
    %v1295 = vunpack.c.h.b16 %v396
    %v1296 = vunpack.c.l.b16 %v397
    %v1297 = vunpack.c.h.b16 %v397
    %v1298 = vunpack.c.l.b16 %v398
    %v1299 = vunpack.c.h.b16 %v398
    %v1300 = vunpack.c.l.b16 %v399
    %v1301 = vunpack.c.h.b16 %v399
    %v1302 = vunpack.c.l.b16 %v400
    %v1303 = vunpack.c.h.b16 %v400
    %v1304 = vunpack.c.l.b16 %v401
    %v1305 = vunpack.c.h.b16 %v401
    %v1306 = vunpack.c.l.b16 %v402
    %v1307 = vunpack.c.h.b16 %v402
    %v1308 = vunpack.c.l.b16 %v403
    %v1309 = vunpack.c.h.b16 %v403
    %v1310 = vunpack.c.l.b16 %v404
    %v1311 = vunpack.c.h.b16 %v404
    %v1312 = vunpack.c.l.b16 %v405
    %v1313 = vunpack.c.h.b16 %v405
    %v1314 = vunpack.c.l.b16 %v406
    %v1315 = vunpack.c.h.b16 %v406
    %v1316 = vunpack.c.l.b16 %v407
    %v1317 = vunpack.c.h.b16 %v407
    %v1318 = vpack.c.b16 %v748, %v742
    %v1319 = vpack.c.b16 %v749, %v743
    %v1320 = vpack.c.b16 %v750, %v744
    %v1321 = vpack.c.b16 %v751, %v745
    %v1322 = vpack.c.b16 %v752, %v746
    %v1323 = vpack.c.b16 %v753, %v747
    %v1324 = vpack.c.b16 %v760, %v754
    %v1325 = vpack.c.b16 %v761, %v755
    %v1326 = vpack.c.b16 %v762, %v756
    %v1327 = vpack.c.b16 %v763, %v757
    %v1328 = vpack.c.b16 %v764, %v758
    %v1329 = vpack.c.b16 %v765, %v759
    %v1330 = vpack.c.b16 %v772, %v766
    %v1331 = vpack.c.b16 %v773, %v767
    %v1332 = vpack.c.b16 %v774, %v768
    %v1333 = vpack.c.b16 %v775, %v769
    %v1334 = vpack.c.b16 %v776, %v770
    %v1335 = vpack.c.b16 %v777, %v771
    %v1336 = vpack.c.b16 %v784, %v778
    %v1337 = vpack.c.b16 %v785, %v779
    %v1338 = vpack.c.b16 %v786, %v780
    %v1339 = vpack.c.b16 %v787, %v781
    %v1340 = vpack.c.b16 %v788, %v782
    %v1341 = vpack.c.b16 %v789, %v783
    %v1342 = vpack.c.b16 %v796, %v790
    %v1343 = vpack.c.b16 %v797, %v791
    %v1344 = vpack.c.b16 %v798, %v792
    %v1345 = vpack.c.b16 %v799, %v793
    %v1346 = vpack.c.b16 %v800, %v794
    %v1347 = vpack.c.b16 %v801, %v795
    %v1348 = vpack.c.b16 %v808, %v802
    %v1349 = vpack.c.b16 %v809, %v803
    %v1350 = vpack.c.b16 %v810, %v804
    %v1351 = vpack.c.b16 %v811, %v805
    %v1352 = vpack.c.b16 %v812, %v806
    %v1353 = vpack.c.b16 %v813, %v807
    %v1354 = vpack.c.b16 %v820, %v814
    %v1355 = vpack.c.b16 %v821, %v815
    %v1356 = vpack.c.b16 %v822, %v816
    %v1357 = vpack.c.b16 %v823, %v817
    %v1358 = vpack.c.b16 %v824, %v818
    %v1359 = vpack.c.b16 %v825, %v819
    %v1360 = vpack.c.b16 %v832, %v826
    %v1361 = vpack.c.b16 %v833, %v827
    %v1362 = vpack.c.b16 %v834, %v828
    %v1363 = vpack.c.b16 %v835, %v829
    %v1364 = vpack.c.b16 %v836, %v830
    %v1365 = vpack.c.b16 %v837, %v831
    %v1366 = vpack.c.b16 %v844, %v838
    %v1367 = vpack.c.b16 %v845, %v839
    %v1368 = vpack.c.b16 %v846, %v840
    %v1369 = vpack.c.b16 %v847, %v841
    %v1370 = vpack.c.b16 %v848, %v842
    %v1371 = vpack.c.b16 %v849, %v843
    %v1372 = vpack.c.b16 %v856, %v850
    %v1373 = vpack.c.b16 %v857, %v851
    %v1374 = vpack.c.b16 %v858, %v852
    %v1375 = vpack.c.b16 %v859, %v853
    %v1376 = vpack.c.b16 %v860, %v854
    %v1377 = vpack.c.b16 %v861, %v855
    %v1378 = vpack.c.b16 %v868, %v862
    %v1379 = vpack.c.b16 %v869, %v863
    %v1380 = vpack.c.b16 %v870, %v864
    %v1381 = vpack.c.b16 %v871, %v865
    %v1382 = vpack.c.b16 %v872, %v866
    %v1383 = vpack.c.b16 %v873, %v867
    %v1384 = vpack.c.b16 %v880, %v874
    %v1385 = vpack.c.b16 %v881, %v875
    %v1386 = vpack.c.b16 %v882, %v876
    %v1387 = vpack.c.b16 %v883, %v877
    %v1388 = vpack.c.b16 %v884, %v878
    %v1389 = vpack.c.b16 %v885, %v879
    %v1390 = vpack.c.b16 %v892, %v886
    %v1391 = vpack.c.b16 %v893, %v887
    %v1392 = vpack.c.b16 %v894, %v888
    %v1393 = vpack.c.b16 %v895, %v889
    %v1394 = vpack.c.b16 %v896, %v890
    %v1395 = vpack.c.b16 %v897, %v891
    %v1396 = vpack.c.b16 %v904, %v898
    %v1397 = vpack.c.b16 %v905, %v899
    %v1398 = vpack.c.b16 %v906, %v900
    %v1399 = vpack.c.b16 %v907, %v901
    %v1400 = vpack.c.b16 %v908, %v902
    %v1401 = vpack.c.b16 %v909, %v903
    %v1402 = vpack.c.b16 %v916, %v910
    %v1403 = vpack.c.b16 %v917, %v911
    %v1404 = vpack.c.b16 %v918, %v912
    %v1405 = vpack.c.b16 %v919, %v913
    %v1406 = vpack.c.b16 %v920, %v914
    %v1407 = vpack.c.b16 %v921, %v915
    %v1408 = vpack.c.b16 %v928, %v922
    %v1409 = vpack.c.b16 %v929, %v923
    %v1410 = vpack.c.b16 %v930, %v924
    %v1411 = vpack.c.b16 %v931, %v925
    %v1412 = vpack.c.b16 %v932, %v926
    %v1413 = vpack.c.b16 %v933, %v927
    %v1414 = vpack.c.b16 %v940, %v934
    %v1415 = vpack.c.b16 %v941, %v935
    %v1416 = vpack.c.b16 %v942, %v936
    %v1417 = vpack.c.b16 %v943, %v937
    %v1418 = vpack.c.b16 %v944, %v938
    %v1419 = vpack.c.b16 %v945, %v939
    %v1420 = vpack.c.b16 %v952, %v946
    %v1421 = vpack.c.b16 %v953, %v947
    %v1422 = vpack.c.b16 %v954, %v948
    %v1423 = vpack.c.b16 %v955, %v949
    %v1424 = vpack.c.b16 %v956, %v950
    %v1425 = vpack.c.b16 %v957, %v951
    %v1426 = vpack.c.b16 %v964, %v958
    %v1427 = vpack.c.b16 %v965, %v959
    %v1428 = vpack.c.b16 %v966, %v960
    %v1429 = vpack.c.b16 %v967, %v961
    %v1430 = vpack.c.b16 %v968, %v962
    %v1431 = vpack.c.b16 %v969, %v963
    %v1432 = vpack.c.b16 %v976, %v970
    %v1433 = vpack.c.b16 %v977, %v971
    %v1434 = vpack.c.b16 %v978, %v972
    %v1435 = vpack.c.b16 %v979, %v973
    %v1436 = vpack.c.b16 %v980, %v974
    %v1437 = vpack.c.b16 %v981, %v975
    %v1438 = vpack.c.b16 %v988, %v982
    %v1439 = vpack.c.b16 %v989, %v983
    %v1440 = vpack.c.b16 %v990, %v984
    %v1441 = vpack.c.b16 %v991, %v985
    %v1442 = vpack.c.b16 %v992, %v986
    %v1443 = vpack.c.b16 %v993, %v987
    %v1444 = vpack.c.b16 %v1000, %v994
    %v1445 = vpack.c.b16 %v1001, %v995
    %v1446 = vpack.c.b16 %v1002, %v996
    %v1447 = vpack.c.b16 %v1003, %v997
    %v1448 = vpack.c.b16 %v1004, %v998
    %v1449 = vpack.c.b16 %v1005, %v999
    %v1450 = vpack.c.b16 %v1012, %v1006
    %v1451 = vpack.c.b16 %v1013, %v1007
    %v1452 = vpack.c.b16 %v1014, %v1008
    %v1453 = vpack.c.b16 %v1015, %v1009
    %v1454 = vpack.c.b16 %v1016, %v1010
    %v1455 = vpack.c.b16 %v1017, %v1011
    %v1456 = vpack.c.b16 %v1024, %v1018
    %v1457 = vpack.c.b16 %v1025, %v1019
    %v1458 = vpack.c.b16 %v1026, %v1020
    %v1459 = vpack.c.b16 %v1027, %v1021
    %v1460 = vpack.c.b16 %v1028, %v1022
    %v1461 = vpack.c.b16 %v1029, %v1023
    %v1462 = vpack.c.b16 %v1036, %v1030
    %v1463 = vpack.c.b16 %v1037, %v1031
    %v1464 = vpack.c.b16 %v1038, %v1032
    %v1465 = vpack.c.b16 %v1039, %v1033
    %v1466 = vpack.c.b16 %v1040, %v1034
    %v1467 = vpack.c.b16 %v1041, %v1035
    %v1468 = vpack.c.b16 %v1048, %v1042
    %v1469 = vpack.c.b16 %v1049, %v1043
    %v1470 = vpack.c.b16 %v1050, %v1044
    %v1471 = vpack.c.b16 %v1051, %v1045
    %v1472 = vpack.c.b16 %v1052, %v1046
    %v1473 = vpack.c.b16 %v1053, %v1047
    %v1474 = vpack.c.b16 %v1060, %v1054
    %v1475 = vpack.c.b16 %v1061, %v1055
    %v1476 = vpack.c.b16 %v1062, %v1056
    %v1477 = vpack.c.b16 %v1063, %v1057
    %v1478 = vpack.c.b16 %v1064, %v1058
    %v1479 = vpack.c.b16 %v1065, %v1059
    %v1480 = vpack.c.b16 %v1072, %v1066
    %v1481 = vpack.c.b16 %v1073, %v1067
    %v1482 = vpack.c.b16 %v1074, %v1068
    %v1483 = vpack.c.b16 %v1075, %v1069
    %v1484 = vpack.c.b16 %v1076, %v1070
    %v1485 = vpack.c.b16 %v1077, %v1071
    %v1486 = vpack.c.b16 %v1084, %v1078
    %v1487 = vpack.c.b16 %v1085, %v1079
    %v1488 = vpack.c.b16 %v1086, %v1080
    %v1489 = vpack.c.b16 %v1087, %v1081
    %v1490 = vpack.c.b16 %v1088, %v1082
    %v1491 = vpack.c.b16 %v1089, %v1083
    %v1492 = vpack.c.b16 %v1096, %v1090
    %v1493 = vpack.c.b16 %v1097, %v1091
    %v1494 = vpack.c.b16 %v1098, %v1092
    %v1495 = vpack.c.b16 %v1099, %v1093
    %v1496 = vpack.c.b16 %v1100, %v1094
    %v1497 = vpack.c.b16 %v1101, %v1095
    %v1498 = vpack.c.b16 %v1108, %v1102
    %v1499 = vpack.c.b16 %v1109, %v1103
    %v1500 = vpack.c.b16 %v1110, %v1104
    %v1501 = vpack.c.b16 %v1111, %v1105
    %v1502 = vpack.c.b16 %v1112, %v1106
    %v1503 = vpack.c.b16 %v1113, %v1107
    %v1504 = vpack.c.b16 %v1120, %v1114
    %v1505 = vpack.c.b16 %v1121, %v1115
    %v1506 = vpack.c.b16 %v1122, %v1116
    %v1507 = vpack.c.b16 %v1123, %v1117
    %v1508 = vpack.c.b16 %v1124, %v1118
    %v1509 = vpack.c.b16 %v1125, %v1119
    %v1510 = vpack.c.b16 %v1132, %v1126
    %v1511 = vpack.c.b16 %v1133, %v1127
    %v1512 = vpack.c.b16 %v1134, %v1128
    %v1513 = vpack.c.b16 %v1135, %v1129
    %v1514 = vpack.c.b16 %v1136, %v1130
    %v1515 = vpack.c.b16 %v1137, %v1131
    %v1516 = vpack.c.b16 %v1144, %v1138
    %v1517 = vpack.c.b16 %v1145, %v1139
    %v1518 = vpack.c.b16 %v1146, %v1140
    %v1519 = vpack.c.b16 %v1147, %v1141
    %v1520 = vpack.c.b16 %v1148, %v1142
    %v1521 = vpack.c.b16 %v1149, %v1143
    %v1522 = vpack.c.b16 %v1156, %v1150
    %v1523 = vpack.c.b16 %v1157, %v1151
    %v1524 = vpack.c.b16 %v1158, %v1152
    %v1525 = vpack.c.b16 %v1159, %v1153
    %v1526 = vpack.c.b16 %v1160, %v1154
    %v1527 = vpack.c.b16 %v1161, %v1155
    %v1528 = vpack.c.b16 %v1168, %v1162
    %v1529 = vpack.c.b16 %v1169, %v1163
    %v1530 = vpack.c.b16 %v1170, %v1164
    %v1531 = vpack.c.b16 %v1171, %v1165
    %v1532 = vpack.c.b16 %v1172, %v1166
    %v1533 = vpack.c.b16 %v1173, %v1167
    %v1534 = vpack.c.b16 %v1180, %v1174
    %v1535 = vpack.c.b16 %v1181, %v1175
    %v1536 = vpack.c.b16 %v1182, %v1176
    %v1537 = vpack.c.b16 %v1183, %v1177
    %v1538 = vpack.c.b16 %v1184, %v1178
    %v1539 = vpack.c.b16 %v1185, %v1179
    %v1540 = vpack.c.b16 %v1192, %v1186
    %v1541 = vpack.c.b16 %v1193, %v1187
    %v1542 = vpack.c.b16 %v1194, %v1188
    %v1543 = vpack.c.b16 %v1195, %v1189
    %v1544 = vpack.c.b16 %v1196, %v1190
    %v1545 = vpack.c.b16 %v1197, %v1191
    %v1546 = vpack.c.b16 %v1204, %v1198
    %v1547 = vpack.c.b16 %v1205, %v1199
    %v1548 = vpack.c.b16 %v1206, %v1200
    %v1549 = vpack.c.b16 %v1207, %v1201
    %v1550 = vpack.c.b16 %v1208, %v1202
    %v1551 = vpack.c.b16 %v1209, %v1203
    %v1552 = vpack.c.b16 %v1216, %v1210
    %v1553 = vpack.c.b16 %v1217, %v1211
    %v1554 = vpack.c.b16 %v1218, %v1212
    %v1555 = vpack.c.b16 %v1219, %v1213
    %v1556 = vpack.c.b16 %v1220, %v1214
    %v1557 = vpack.c.b16 %v1221, %v1215
    %v1558 = vpack.c.b16 %v1228, %v1222
    %v1559 = vpack.c.b16 %v1229, %v1223
    %v1560 = vpack.c.b16 %v1230, %v1224
    %v1561 = vpack.c.b16 %v1231, %v1225
    %v1562 = vpack.c.b16 %v1232, %v1226
    %v1563 = vpack.c.b16 %v1233, %v1227
    %v1564 = vpack.c.b16 %v1240, %v1234
    %v1565 = vpack.c.b16 %v1241, %v1235
    %v1566 = vpack.c.b16 %v1242, %v1236
    %v1567 = vpack.c.b16 %v1243, %v1237
    %v1568 = vpack.c.b16 %v1244, %v1238
    %v1569 = vpack.c.b16 %v1245, %v1239
    %v1570 = vpack.c.b16 %v1252, %v1246
    %v1571 = vpack.c.b16 %v1253, %v1247
    %v1572 = vpack.c.b16 %v1254, %v1248
    %v1573 = vpack.c.b16 %v1255, %v1249
    %v1574 = vpack.c.b16 %v1256, %v1250
    %v1575 = vpack.c.b16 %v1257, %v1251
    %v1576 = vpack.c.b16 %v1264, %v1258
    %v1577 = vpack.c.b16 %v1265, %v1259
    %v1578 = vpack.c.b16 %v1266, %v1260
    %v1579 = vpack.c.b16 %v1267, %v1261
    %v1580 = vpack.c.b16 %v1268, %v1262
    %v1581 = vpack.c.b16 %v1269, %v1263
    %v1582 = vpack.c.b16 %v1276, %v1270
    %v1583 = vpack.c.b16 %v1277, %v1271
    %v1584 = vpack.c.b16 %v1278, %v1272
    %v1585 = vpack.c.b16 %v1279, %v1273
    %v1586 = vpack.c.b16 %v1280, %v1274
    %v1587 = vpack.c.b16 %v1281, %v1275
    %v1588 = vpack.c.b16 %v1288, %v1282
    %v1589 = vpack.c.b16 %v1289, %v1283
    %v1590 = vpack.c.b16 %v1290, %v1284
    %v1591 = vpack.c.b16 %v1291, %v1285
    %v1592 = vpack.c.b16 %v1292, %v1286
    %v1593 = vpack.c.b16 %v1293, %v1287
    %v1594 = vpack.c.b16 %v1300, %v1294
    %v1595 = vpack.c.b16 %v1301, %v1295
    %v1596 = vpack.c.b16 %v1302, %v1296
    %v1597 = vpack.c.b16 %v1303, %v1297
    %v1598 = vpack.c.b16 %v1304, %v1298
    %v1599 = vpack.c.b16 %v1305, %v1299
    %v1600 = vpack.c.b16 %v1312, %v1306
    %v1601 = vpack.c.b16 %v1313, %v1307
    %v1602 = vpack.c.b16 %v1314, %v1308
    %v1603 = vpack.c.b16 %v1315, %v1309
    %v1604 = vpack.c.b16 %v1316, %v1310
    %v1605 = vpack.c.b16 %v1317, %v1311
    %1894 = vmatprep.subr.bf16.mxu0 %v1361
    %1895 = vmatpush1.bf16.msra.mxu0 %v1360
    %1896 = vmatprep.subr.bf16.mxu0 %v1355
    %1897 = vmatpush1.bf16.msra.mxu0 %v1354
    %1898 = vmatprep.subr.bf16.mxu0 %v1349
    %1899 = vmatpush1.bf16.msra.mxu0 %v1348
    %1900 = vmatprep.subr.bf16.mxu0 %v1343
    %1901 = vmatpush1.bf16.msra.mxu0 %v1342
    %1902 = vmatprep.subr.bf16.mxu0 %v1337
    %1903 = vmatpush1.bf16.msra.mxu0 %v1336
    %1904 = vmatprep.subr.bf16.mxu0 %v1331
    %1905 = vmatpush1.bf16.msra.mxu0 %v1330
    %1906 = vmatprep.subr.bf16.mxu0 %v1325
    %1907 = vmatpush1.bf16.msra.mxu0 %v1324
    %1908 = vmatprep.subr.bf16.mxu0 %v1319
    %1909 = vmatpush1.bf16.msra.mxu0 %v1318
    %1910 = vmatprep.subr.bf16.mxu0 %v1409
    %1911 = vmatpush2.bf16.msra.mxu0 %v1408
    %1912 = vmatprep.subr.bf16.mxu0 %v1403
    %1913 = vmatpush2.bf16.msra.mxu0 %v1402
    %1914 = vmatprep.subr.bf16.mxu0 %v1397
    %1915 = vmatpush2.bf16.msra.mxu0 %v1396
    %1916 = vmatprep.subr.bf16.mxu0 %v1391
    %1917 = vmatpush2.bf16.msra.mxu0 %v1390
    %1918 = vmatprep.subr.bf16.mxu0 %v1385
    %1919 = vmatpush2.bf16.msra.mxu0 %v1384
    %1920 = vmatprep.subr.bf16.mxu0 %v1379
    %1921 = vmatpush2.bf16.msra.mxu0 %v1378
    %1922 = vmatprep.subr.bf16.mxu0 %v1373
    %1923 = vmatpush2.bf16.msra.mxu0 %v1372
    %1924 = vmatprep.subr.bf16.mxu0 %v1367
    %1925 = vmatpush2.bf16.msra.mxu0 %v1366
    %1926 = vmatprep.mubr.bf16.mxu0 %v409
    %1927 = vmatmul.mubr.bf16.gmra.mxu0 %v408
    %v1928 = vpop.f32.mrf.mxu0
    %v1929 = vadd.f32 %v427, %v1928
    %v1930 = vpop.f32.mrf.mxu0
    %v1931 = vadd.f32 %v431, %v1930
    %v1932 = vpop.f32.mrf.mxu0
    %v1933 = vpop.f32.mrf.mxu0
    %1934 = vmatprep.mubr.bf16.mxu0 %v415
    %1935 = vmatmul.mubr.bf16.gmra.mxu0 %v414
    %v1936 = vpop.f32.mrf.mxu0
    %v1937 = vpop.f32.mrf.mxu0
    %v1938 = vpop.f32.mrf.mxu0
    %v1939 = vpop.f32.mrf.mxu0
    %1940 = vdwg.mxu0
    %1941 = vmatprep.subr.bf16.mxu0 %v1457
    %1942 = vmatpush1.bf16.msra.mxu0 %v1456
    %1943 = vmatprep.subr.bf16.mxu0 %v1451
    %1944 = vmatpush1.bf16.msra.mxu0 %v1450
    %1945 = vmatprep.subr.bf16.mxu0 %v1445
    %1946 = vmatpush1.bf16.msra.mxu0 %v1444
    %1947 = vmatprep.subr.bf16.mxu0 %v1439
    %1948 = vmatpush1.bf16.msra.mxu0 %v1438
    %1949 = vmatprep.subr.bf16.mxu0 %v1433
    %1950 = vmatpush1.bf16.msra.mxu0 %v1432
    %1951 = vmatprep.subr.bf16.mxu0 %v1427
    %1952 = vmatpush1.bf16.msra.mxu0 %v1426
    %1953 = vmatprep.subr.bf16.mxu0 %v1421
    %1954 = vmatpush1.bf16.msra.mxu0 %v1420
    %1955 = vmatprep.subr.bf16.mxu0 %v1415
    %1956 = vmatpush1.bf16.msra.mxu0 %v1414
    %1957 = vmatprep.subr.bf16.mxu0 %v1505
    %1958 = vmatpush2.bf16.msra.mxu0 %v1504
    %1959 = vmatprep.subr.bf16.mxu0 %v1499
    %1960 = vmatpush2.bf16.msra.mxu0 %v1498
    %1961 = vmatprep.subr.bf16.mxu0 %v1493
    %1962 = vmatpush2.bf16.msra.mxu0 %v1492
    %1963 = vmatprep.subr.bf16.mxu0 %v1487
    %1964 = vmatpush2.bf16.msra.mxu0 %v1486
    %1965 = vmatprep.subr.bf16.mxu0 %v1481
    %1966 = vmatpush2.bf16.msra.mxu0 %v1480
    %1967 = vmatprep.subr.bf16.mxu0 %v1475
    %1968 = vmatpush2.bf16.msra.mxu0 %v1474
    %1969 = vmatprep.subr.bf16.mxu0 %v1469
    %1970 = vmatpush2.bf16.msra.mxu0 %v1468
    %1971 = vmatprep.subr.bf16.mxu0 %v1463
    %1972 = vmatpush2.bf16.msra.mxu0 %v1462
    %1973 = vmatprep.mubr.bf16.mxu0 %v411
    %1974 = vmatmul.mubr.bf16.gmra.mxu0 %v410
    %v1975 = vpop.f32.mrf.mxu0
    %v1976 = vadd.f32 %v1929, %v1975
    %v1977 = vpop.f32.mrf.mxu0
    %v1978 = vadd.f32 %v1931, %v1977
    %v1979 = vpop.f32.mrf.mxu0
    %v1980 = vpop.f32.mrf.mxu0
    %1981 = vmatprep.mubr.bf16.mxu0 %v417
    %1982 = vmatmul.mubr.bf16.gmra.mxu0 %v416
    %v1983 = vpop.f32.mrf.mxu0
    %v1984 = vpop.f32.mrf.mxu0
    %v1985 = vpop.f32.mrf.mxu0
    %v1986 = vpop.f32.mrf.mxu0
    %1987 = vdwg.mxu0
    %1988 = vmatprep.subr.bf16.mxu0 %v1553
    %1989 = vmatpush1.bf16.msra.mxu0 %v1552
    %1990 = vmatprep.subr.bf16.mxu0 %v1547
    %1991 = vmatpush1.bf16.msra.mxu0 %v1546
    %1992 = vmatprep.subr.bf16.mxu0 %v1541
    %1993 = vmatpush1.bf16.msra.mxu0 %v1540
    %1994 = vmatprep.subr.bf16.mxu0 %v1535
    %1995 = vmatpush1.bf16.msra.mxu0 %v1534
    %1996 = vmatprep.subr.bf16.mxu0 %v1529
    %1997 = vmatpush1.bf16.msra.mxu0 %v1528
    %1998 = vmatprep.subr.bf16.mxu0 %v1523
    %1999 = vmatpush1.bf16.msra.mxu0 %v1522
    %2000 = vmatprep.subr.bf16.mxu0 %v1517
    %2001 = vmatpush1.bf16.msra.mxu0 %v1516
    %2002 = vmatprep.subr.bf16.mxu0 %v1511
    %2003 = vmatpush1.bf16.msra.mxu0 %v1510
    %2004 = vmatprep.subr.bf16.mxu0 %v1601
    %2005 = vmatpush2.bf16.msra.mxu0 %v1600
    %2006 = vmatprep.subr.bf16.mxu0 %v1595
    %2007 = vmatpush2.bf16.msra.mxu0 %v1594
    %2008 = vmatprep.subr.bf16.mxu0 %v1589
    %2009 = vmatpush2.bf16.msra.mxu0 %v1588
    %2010 = vmatprep.subr.bf16.mxu0 %v1583
    %2011 = vmatpush2.bf16.msra.mxu0 %v1582
    %2012 = vmatprep.subr.bf16.mxu0 %v1577
    %2013 = vmatpush2.bf16.msra.mxu0 %v1576
    %2014 = vmatprep.subr.bf16.mxu0 %v1571
    %2015 = vmatpush2.bf16.msra.mxu0 %v1570
    %2016 = vmatprep.subr.bf16.mxu0 %v1565
    %2017 = vmatpush2.bf16.msra.mxu0 %v1564
    %2018 = vmatprep.subr.bf16.mxu0 %v1559
    %2019 = vmatpush2.bf16.msra.mxu0 %v1558
    %2020 = vmatprep.mubr.bf16.mxu0 %v413
    %2021 = vmatmul.mubr.bf16.gmra.mxu0 %v412
    %v2022 = vpop.f32.mrf.mxu0
    %v2023 = vadd.f32 %v1976, %v2022
    %v2024 = vpop.f32.mrf.mxu0
    %v2025 = vadd.f32 %v1978, %v2024
    %v2026 = vpop.f32.mrf.mxu0
    %v2027 = vpop.f32.mrf.mxu0
    %2028 = vmatprep.mubr.bf16.mxu0 %v419
    %2029 = vmatmul.mubr.bf16.gmra.mxu0 %v418
    %v2030 = vpop.f32.mrf.mxu0
    %v2031 = vpop.f32.mrf.mxu0
    %v2032 = vpop.f32.mrf.mxu0
    %v2033 = vpop.f32.mrf.mxu0
    %2034 = vdwg.mxu0
    %2035 = vmatprep.subr.bf16.mxu0 %v1363
    %2036 = vmatpush1.bf16.msra.mxu0 %v1362
    %2037 = vmatprep.subr.bf16.mxu0 %v1357
    %2038 = vmatpush1.bf16.msra.mxu0 %v1356
    %2039 = vmatprep.subr.bf16.mxu0 %v1351
    %2040 = vmatpush1.bf16.msra.mxu0 %v1350
    %2041 = vmatprep.subr.bf16.mxu0 %v1345
    %2042 = vmatpush1.bf16.msra.mxu0 %v1344
    %2043 = vmatprep.subr.bf16.mxu0 %v1339
    %2044 = vmatpush1.bf16.msra.mxu0 %v1338
    %2045 = vmatprep.subr.bf16.mxu0 %v1333
    %2046 = vmatpush1.bf16.msra.mxu0 %v1332
    %2047 = vmatprep.subr.bf16.mxu0 %v1327
    %2048 = vmatpush1.bf16.msra.mxu0 %v1326
    %2049 = vmatprep.subr.bf16.mxu0 %v1321
    %2050 = vmatpush1.bf16.msra.mxu0 %v1320
    %2051 = vmatprep.subr.bf16.mxu0 %v1411
    %2052 = vmatpush2.bf16.msra.mxu0 %v1410
    %2053 = vmatprep.subr.bf16.mxu0 %v1405
    %2054 = vmatpush2.bf16.msra.mxu0 %v1404
    %2055 = vmatprep.subr.bf16.mxu0 %v1399
    %2056 = vmatpush2.bf16.msra.mxu0 %v1398
    %2057 = vmatprep.subr.bf16.mxu0 %v1393
    %2058 = vmatpush2.bf16.msra.mxu0 %v1392
    %2059 = vmatprep.subr.bf16.mxu0 %v1387
    %2060 = vmatpush2.bf16.msra.mxu0 %v1386
    %2061 = vmatprep.subr.bf16.mxu0 %v1381
    %2062 = vmatpush2.bf16.msra.mxu0 %v1380
    %2063 = vmatprep.subr.bf16.mxu0 %v1375
    %2064 = vmatpush2.bf16.msra.mxu0 %v1374
    %2065 = vmatprep.subr.bf16.mxu0 %v1369
    %2066 = vmatpush2.bf16.msra.mxu0 %v1368
    %2067 = vmatprep.mubr.bf16.mxu0 %v409
    %2068 = vmatmul.mubr.bf16.gmra.mxu0 %v408
    %v2069 = vpop.f32.mrf.mxu0
    %v2070 = vpop.f32.mrf.mxu0
    %v2071 = vpop.f32.mrf.mxu0
    %v2072 = vadd.f32 %v435, %v2071
    %v2073 = vpop.f32.mrf.mxu0
    %v2074 = vadd.f32 %v439, %v2073
    %2075 = vmatprep.mubr.bf16.mxu0 %v415
    %2076 = vmatmul.mubr.bf16.gmra.mxu0 %v414
    %v2077 = vpop.f32.mrf.mxu0
    %v2078 = vpop.f32.mrf.mxu0
    %v2079 = vpop.f32.mrf.mxu0
    %v2080 = vpop.f32.mrf.mxu0
    %2081 = vdwg.mxu0
    %2082 = vmatprep.subr.bf16.mxu0 %v1459
    %2083 = vmatpush1.bf16.msra.mxu0 %v1458
    %2084 = vmatprep.subr.bf16.mxu0 %v1453
    %2085 = vmatpush1.bf16.msra.mxu0 %v1452
    %2086 = vmatprep.subr.bf16.mxu0 %v1447
    %2087 = vmatpush1.bf16.msra.mxu0 %v1446
    %2088 = vmatprep.subr.bf16.mxu0 %v1441
    %2089 = vmatpush1.bf16.msra.mxu0 %v1440
    %2090 = vmatprep.subr.bf16.mxu0 %v1435
    %2091 = vmatpush1.bf16.msra.mxu0 %v1434
    %2092 = vmatprep.subr.bf16.mxu0 %v1429
    %2093 = vmatpush1.bf16.msra.mxu0 %v1428
    %2094 = vmatprep.subr.bf16.mxu0 %v1423
    %2095 = vmatpush1.bf16.msra.mxu0 %v1422
    %2096 = vmatprep.subr.bf16.mxu0 %v1417
    %2097 = vmatpush1.bf16.msra.mxu0 %v1416
    %2098 = vmatprep.subr.bf16.mxu0 %v1507
    %2099 = vmatpush2.bf16.msra.mxu0 %v1506
    %2100 = vmatprep.subr.bf16.mxu0 %v1501
    %2101 = vmatpush2.bf16.msra.mxu0 %v1500
    %2102 = vmatprep.subr.bf16.mxu0 %v1495
    %2103 = vmatpush2.bf16.msra.mxu0 %v1494
    %2104 = vmatprep.subr.bf16.mxu0 %v1489
    %2105 = vmatpush2.bf16.msra.mxu0 %v1488
    %2106 = vmatprep.subr.bf16.mxu0 %v1483
    %2107 = vmatpush2.bf16.msra.mxu0 %v1482
    %2108 = vmatprep.subr.bf16.mxu0 %v1477
    %2109 = vmatpush2.bf16.msra.mxu0 %v1476
    %2110 = vmatprep.subr.bf16.mxu0 %v1471
    %2111 = vmatpush2.bf16.msra.mxu0 %v1470
    %2112 = vmatprep.subr.bf16.mxu0 %v1465
    %2113 = vmatpush2.bf16.msra.mxu0 %v1464
    %2114 = vmatprep.mubr.bf16.mxu0 %v411
    %2115 = vmatmul.mubr.bf16.gmra.mxu0 %v410
    %v2116 = vpop.f32.mrf.mxu0
    %v2117 = vpop.f32.mrf.mxu0
    %v2118 = vpop.f32.mrf.mxu0
    %v2119 = vadd.f32 %v2072, %v2118
    %v2120 = vpop.f32.mrf.mxu0
    %v2121 = vadd.f32 %v2074, %v2120
    %2122 = vmatprep.mubr.bf16.mxu0 %v417
    %2123 = vmatmul.mubr.bf16.gmra.mxu0 %v416
    %v2124 = vpop.f32.mrf.mxu0
    %v2125 = vpop.f32.mrf.mxu0
    %v2126 = vpop.f32.mrf.mxu0
    %v2127 = vpop.f32.mrf.mxu0
    %2128 = vdwg.mxu0
    %2129 = vmatprep.subr.bf16.mxu0 %v1555
    %2130 = vmatpush1.bf16.msra.mxu0 %v1554
    %2131 = vmatprep.subr.bf16.mxu0 %v1549
    %2132 = vmatpush1.bf16.msra.mxu0 %v1548
    %2133 = vmatprep.subr.bf16.mxu0 %v1543
    %2134 = vmatpush1.bf16.msra.mxu0 %v1542
    %2135 = vmatprep.subr.bf16.mxu0 %v1537
    %2136 = vmatpush1.bf16.msra.mxu0 %v1536
    %2137 = vmatprep.subr.bf16.mxu0 %v1531
    %2138 = vmatpush1.bf16.msra.mxu0 %v1530
    %2139 = vmatprep.subr.bf16.mxu0 %v1525
    %2140 = vmatpush1.bf16.msra.mxu0 %v1524
    %2141 = vmatprep.subr.bf16.mxu0 %v1519
    %2142 = vmatpush1.bf16.msra.mxu0 %v1518
    %2143 = vmatprep.subr.bf16.mxu0 %v1513
    %2144 = vmatpush1.bf16.msra.mxu0 %v1512
    %2145 = vmatprep.subr.bf16.mxu0 %v1603
    %2146 = vmatpush2.bf16.msra.mxu0 %v1602
    %2147 = vmatprep.subr.bf16.mxu0 %v1597
    %2148 = vmatpush2.bf16.msra.mxu0 %v1596
    %2149 = vmatprep.subr.bf16.mxu0 %v1591
    %2150 = vmatpush2.bf16.msra.mxu0 %v1590
    %2151 = vmatprep.subr.bf16.mxu0 %v1585
    %2152 = vmatpush2.bf16.msra.mxu0 %v1584
    %2153 = vmatprep.subr.bf16.mxu0 %v1579
    %2154 = vmatpush2.bf16.msra.mxu0 %v1578
    %2155 = vmatprep.subr.bf16.mxu0 %v1573
    %2156 = vmatpush2.bf16.msra.mxu0 %v1572
    %2157 = vmatprep.subr.bf16.mxu0 %v1567
    %2158 = vmatpush2.bf16.msra.mxu0 %v1566
    %2159 = vmatprep.subr.bf16.mxu0 %v1561
    %2160 = vmatpush2.bf16.msra.mxu0 %v1560
    %2161 = vmatprep.mubr.bf16.mxu0 %v413
    %2162 = vmatmul.mubr.bf16.gmra.mxu0 %v412
    %v2163 = vpop.f32.mrf.mxu0
    %v2164 = vpop.f32.mrf.mxu0
    %v2165 = vpop.f32.mrf.mxu0
    %v2166 = vadd.f32 %v2119, %v2165
    %v2167 = vpop.f32.mrf.mxu0
    %v2168 = vadd.f32 %v2121, %v2167
    %2169 = vmatprep.mubr.bf16.mxu0 %v419
    %2170 = vmatmul.mubr.bf16.gmra.mxu0 %v418
    %v2171 = vpop.f32.mrf.mxu0
    %v2172 = vpop.f32.mrf.mxu0
    %v2173 = vpop.f32.mrf.mxu0
    %v2174 = vpop.f32.mrf.mxu0
    %2175 = vdwg.mxu0
    %2176 = vmatprep.subr.bf16.mxu0 %v1365
    %2177 = vmatpush1.bf16.msra.mxu0 %v1364
    %2178 = vmatprep.subr.bf16.mxu0 %v1359
    %2179 = vmatpush1.bf16.msra.mxu0 %v1358
    %2180 = vmatprep.subr.bf16.mxu0 %v1353
    %2181 = vmatpush1.bf16.msra.mxu0 %v1352
    %2182 = vmatprep.subr.bf16.mxu0 %v1347
    %2183 = vmatpush1.bf16.msra.mxu0 %v1346
    %2184 = vmatprep.subr.bf16.mxu0 %v1341
    %2185 = vmatpush1.bf16.msra.mxu0 %v1340
    %2186 = vmatprep.subr.bf16.mxu0 %v1335
    %2187 = vmatpush1.bf16.msra.mxu0 %v1334
    %2188 = vmatprep.subr.bf16.mxu0 %v1329
    %2189 = vmatpush1.bf16.msra.mxu0 %v1328
    %2190 = vmatprep.subr.bf16.mxu0 %v1323
    %2191 = vmatpush1.bf16.msra.mxu0 %v1322
    %2192 = vmatprep.subr.bf16.mxu0 %v1413
    %2193 = vmatpush2.bf16.msra.mxu0 %v1412
    %2194 = vmatprep.subr.bf16.mxu0 %v1407
    %2195 = vmatpush2.bf16.msra.mxu0 %v1406
    %2196 = vmatprep.subr.bf16.mxu0 %v1401
    %2197 = vmatpush2.bf16.msra.mxu0 %v1400
    %2198 = vmatprep.subr.bf16.mxu0 %v1395
    %2199 = vmatpush2.bf16.msra.mxu0 %v1394
    %2200 = vmatprep.subr.bf16.mxu0 %v1389
    %2201 = vmatpush2.bf16.msra.mxu0 %v1388
    %2202 = vmatprep.subr.bf16.mxu0 %v1383
    %2203 = vmatpush2.bf16.msra.mxu0 %v1382
    %2204 = vmatprep.subr.bf16.mxu0 %v1377
    %2205 = vmatpush2.bf16.msra.mxu0 %v1376
    %2206 = vmatprep.subr.bf16.mxu0 %v1371
    %2207 = vmatpush2.bf16.msra.mxu0 %v1370
    %2208 = vmatprep.mubr.bf16.mxu0 %v409
    %2209 = vmatmul.mubr.bf16.gmra.mxu0 %v408
    %v2210 = vpop.f32.mrf.mxu0
    %v2211 = vpop.f32.mrf.mxu0
    %v2212 = vpop.f32.mrf.mxu0
    %v2213 = vpop.f32.mrf.mxu0
    %2214 = vmatprep.mubr.bf16.mxu0 %v415
    %2215 = vmatmul.mubr.bf16.gmra.mxu0 %v414
    %v2216 = vpop.f32.mrf.mxu0
    %v2217 = vadd.f32 %v443, %v2216
    %v2218 = vpop.f32.mrf.mxu0
    %v2219 = vpop.f32.mrf.mxu0
    %v2220 = vpop.f32.mrf.mxu0
    %v2221 = vadd.f32 %v447, %v2220
    %2222 = vdwg.mxu0
    %2223 = vmatprep.subr.bf16.mxu0 %v1461
    %2224 = vmatpush1.bf16.msra.mxu0 %v1460
    %2225 = vmatprep.subr.bf16.mxu0 %v1455
    %2226 = vmatpush1.bf16.msra.mxu0 %v1454
    %2227 = vmatprep.subr.bf16.mxu0 %v1449
    %2228 = vmatpush1.bf16.msra.mxu0 %v1448
    %2229 = vmatprep.subr.bf16.mxu0 %v1443
    %2230 = vmatpush1.bf16.msra.mxu0 %v1442
    %2231 = vmatprep.subr.bf16.mxu0 %v1437
    %2232 = vmatpush1.bf16.msra.mxu0 %v1436
    %2233 = vmatprep.subr.bf16.mxu0 %v1431
    %2234 = vmatpush1.bf16.msra.mxu0 %v1430
    %2235 = vmatprep.subr.bf16.mxu0 %v1425
    %2236 = vmatpush1.bf16.msra.mxu0 %v1424
    %2237 = vmatprep.subr.bf16.mxu0 %v1419
    %2238 = vmatpush1.bf16.msra.mxu0 %v1418
    %2239 = vmatprep.subr.bf16.mxu0 %v1509
    %2240 = vmatpush2.bf16.msra.mxu0 %v1508
    %2241 = vmatprep.subr.bf16.mxu0 %v1503
    %2242 = vmatpush2.bf16.msra.mxu0 %v1502
    %2243 = vmatprep.subr.bf16.mxu0 %v1497
    %2244 = vmatpush2.bf16.msra.mxu0 %v1496
    %2245 = vmatprep.subr.bf16.mxu0 %v1491
    %2246 = vmatpush2.bf16.msra.mxu0 %v1490
    %2247 = vmatprep.subr.bf16.mxu0 %v1485
    %2248 = vmatpush2.bf16.msra.mxu0 %v1484
    %2249 = vmatprep.subr.bf16.mxu0 %v1479
    %2250 = vmatpush2.bf16.msra.mxu0 %v1478
    %2251 = vmatprep.subr.bf16.mxu0 %v1473
    %2252 = vmatpush2.bf16.msra.mxu0 %v1472
    %2253 = vmatprep.subr.bf16.mxu0 %v1467
    %2254 = vmatpush2.bf16.msra.mxu0 %v1466
    %2255 = vmatprep.mubr.bf16.mxu0 %v411
    %2256 = vmatmul.mubr.bf16.gmra.mxu0 %v410
    %v2257 = vpop.f32.mrf.mxu0
    %v2258 = vpop.f32.mrf.mxu0
    %v2259 = vpop.f32.mrf.mxu0
    %v2260 = vpop.f32.mrf.mxu0
    %2261 = vmatprep.mubr.bf16.mxu0 %v417
    %2262 = vmatmul.mubr.bf16.gmra.mxu0 %v416
    %v2263 = vpop.f32.mrf.mxu0
    %v2264 = vadd.f32 %v2217, %v2263
    %v2265 = vpop.f32.mrf.mxu0
    %v2266 = vpop.f32.mrf.mxu0
    %v2267 = vpop.f32.mrf.mxu0
    %v2268 = vadd.f32 %v2221, %v2267
    %2269 = vdwg.mxu0
    %2270 = vmatprep.subr.bf16.mxu0 %v1557
    %2271 = vmatpush1.bf16.msra.mxu0 %v1556
    %2272 = vmatprep.subr.bf16.mxu0 %v1551
    %2273 = vmatpush1.bf16.msra.mxu0 %v1550
    %2274 = vmatprep.subr.bf16.mxu0 %v1545
    %2275 = vmatpush1.bf16.msra.mxu0 %v1544
    %2276 = vmatprep.subr.bf16.mxu0 %v1539
    %2277 = vmatpush1.bf16.msra.mxu0 %v1538
    %2278 = vmatprep.subr.bf16.mxu0 %v1533
    %2279 = vmatpush1.bf16.msra.mxu0 %v1532
    %2280 = vmatprep.subr.bf16.mxu0 %v1527
    %2281 = vmatpush1.bf16.msra.mxu0 %v1526
    %2282 = vmatprep.subr.bf16.mxu0 %v1521
    %2283 = vmatpush1.bf16.msra.mxu0 %v1520
    %2284 = vmatprep.subr.bf16.mxu0 %v1515
    %2285 = vmatpush1.bf16.msra.mxu0 %v1514
    %2286 = vmatprep.subr.bf16.mxu0 %v1605
    %2287 = vmatpush2.bf16.msra.mxu0 %v1604
    %2288 = vmatprep.subr.bf16.mxu0 %v1599
    %2289 = vmatpush2.bf16.msra.mxu0 %v1598
    %2290 = vmatprep.subr.bf16.mxu0 %v1593
    %2291 = vmatpush2.bf16.msra.mxu0 %v1592
    %2292 = vmatprep.subr.bf16.mxu0 %v1587
    %2293 = vmatpush2.bf16.msra.mxu0 %v1586
    %2294 = vmatprep.subr.bf16.mxu0 %v1581
    %2295 = vmatpush2.bf16.msra.mxu0 %v1580
    %2296 = vmatprep.subr.bf16.mxu0 %v1575
    %2297 = vmatpush2.bf16.msra.mxu0 %v1574
    %2298 = vmatprep.subr.bf16.mxu0 %v1569
    %2299 = vmatpush2.bf16.msra.mxu0 %v1568
    %2300 = vmatprep.subr.bf16.mxu0 %v1563
    %2301 = vmatpush2.bf16.msra.mxu0 %v1562
    %2302 = vmatprep.mubr.bf16.mxu0 %v413
    %2303 = vmatmul.mubr.bf16.gmra.mxu0 %v412
    %v2304 = vpop.f32.mrf.mxu0
    %v2305 = vpop.f32.mrf.mxu0
    %v2306 = vpop.f32.mrf.mxu0
    %v2307 = vpop.f32.mrf.mxu0
    %2308 = vmatprep.mubr.bf16.mxu0 %v419
    %2309 = vmatmul.mubr.bf16.gmra.mxu0 %v418
    %v2310 = vpop.f32.mrf.mxu0
    %v2311 = vadd.f32 %v2264, %v2310
    %v2312 = vpop.f32.mrf.mxu0
    %v2313 = vpop.f32.mrf.mxu0
    %v2314 = vpop.f32.mrf.mxu0
    %v2315 = vadd.f32 %v2268, %v2314
    %2316 = vdwg.mxu0
    %v2317 = vmax.f32 %v2023, 0.0
    %v2318 = vmax.f32 %v2025, 0.0
    %v2319 = vmax.f32 %v2166, 0.0
    %v2320 = vmax.f32 %v2168, 0.0
    %v2321 = vmax.f32 %v2311, 0.0
    %v2322 = vmax.f32 %v2315, 0.0
    %v2323 = vld [vmem:[#allocation9 + $0x900] sm:$0xff]
    %v2324 = vld [vmem:[#allocation9 + $0x908] sm:$0xf]
    %v2325 = vld [vmem:[#allocation9 + $0x918] sm:$0xff]
    %v2326 = vld [vmem:[#allocation9 + $0x920] sm:$0xf]
    %v2327 = vld [vmem:[#allocation9 + $0x930] sm:$0xff]
    %v2328 = vld [vmem:[#allocation9 + $0x938] sm:$0xf]
    %v2329 = vld [vmem:[#allocation9 + $0x948] sm:$0xff]
    %v2330 = vld [vmem:[#allocation9 + $0x950] sm:$0xf]
    %v2331 = vld [vmem:[#allocation9 + $0x960] sm:$0xff]
    %v2332 = vld [vmem:[#allocation9 + $0x968] sm:$0xf]
    %v2333 = vld [vmem:[#allocation9 + $0x978] sm:$0xff]
    %v2334 = vld [vmem:[#allocation9 + $0x980] sm:$0xf]
    %v2335 = vld [vmem:[#allocation9 + $0x990] sm:$0xff]
    %v2336 = vld [vmem:[#allocation9 + $0x998] sm:$0xf]
    %v2337 = vld [vmem:[#allocation9 + $0x9a8] sm:$0xff]
    %v2338 = vld [vmem:[#allocation9 + $0x9b0] sm:$0xf]
    %v2339 = vld [vmem:[#allocation9 + $0x9c0] sm:$0xff]
    %v2340 = vld [vmem:[#allocation9 + $0x9c8] sm:$0xf]
    %v2341 = vld [vmem:[#allocation9 + $0x9d8] sm:$0xff]
    %v2342 = vld [vmem:[#allocation9 + $0x9e0] sm:$0xf]
    %v2343 = vld [vmem:[#allocation9 + $0x9f0] sm:$0xff]
    %v2344 = vld [vmem:[#allocation9 + $0x9f8] sm:$0xf]
    %v2345 = vld [vmem:[#allocation9 + $0xa08] sm:$0xff]
    %v2346 = vld [vmem:[#allocation9 + $0xa10] sm:$0xf]
    %v2347 = vld [vmem:[#allocation9 + $0xa20] sm:$0xff]
    %v2348 = vld [vmem:[#allocation9 + $0xa28] sm:$0xf]
    %v2349 = vld [vmem:[#allocation9 + $0xa38] sm:$0xff]
    %v2350 = vld [vmem:[#allocation9 + $0xa40] sm:$0xf]
    %v2351 = vld [vmem:[#allocation9 + $0xa50] sm:$0xff]
    %v2352 = vld [vmem:[#allocation9 + $0xa58] sm:$0xf]
    %v2353 = vld [vmem:[#allocation9 + $0xa68] sm:$0xff]
    %v2354 = vld [vmem:[#allocation9 + $0xa70] sm:$0xf]
    %v2355 = vld [vmem:[#allocation9 + $0xa80] sm:$0xff]
    %v2356 = vld [vmem:[#allocation9 + $0xa88] sm:$0xf]
    %v2357 = vld [vmem:[#allocation9 + $0xa98] sm:$0xff]
    %v2358 = vld [vmem:[#allocation9 + $0xaa0] sm:$0xf]
    %v2359 = vld [vmem:[#allocation9 + $0xab0] sm:$0xff]
    %v2360 = vld [vmem:[#allocation9 + $0xab8] sm:$0xf]
    %v2361 = vld [vmem:[#allocation9 + $0xac8] sm:$0xff]
    %v2362 = vld [vmem:[#allocation9 + $0xad0] sm:$0xf]
    %v2363 = vld [vmem:[#allocation9 + $0xae0] sm:$0xff]
    %v2364 = vld [vmem:[#allocation9 + $0xae8] sm:$0xf]
    %v2365 = vld [vmem:[#allocation9 + $0xaf8] sm:$0xff]
    %v2366 = vld [vmem:[#allocation9 + $0xb00] sm:$0xf]
    %v2367 = vld [vmem:[#allocation9 + $0xb10] sm:$0xff]
    %v2368 = vld [vmem:[#allocation9 + $0xb18] sm:$0xf]
    %v2369 = vld [vmem:[#allocation9 + $0xb28] sm:$0xff]
    %v2370 = vld [vmem:[#allocation9 + $0xb30] sm:$0xf]
    %v2371 = vld [vmem:[#allocation9 + $0xb40] sm:$0xff]
    %v2372 = vld [vmem:[#allocation9 + $0xb48] sm:$0xf]
    %v2373 = vld [vmem:[#allocation9 + $0xb58] sm:$0xff]
    %v2374 = vld [vmem:[#allocation9 + $0xb60] sm:$0xf]
    %v2375 = vld [vmem:[#allocation9 + $0xb70] sm:$0xff]
    %v2376 = vld [vmem:[#allocation9 + $0xb78] sm:$0xf]
    %v2377 = vld [vmem:[#allocation9 + $0xb88] sm:$0xff]
    %v2378 = vld [vmem:[#allocation9 + $0xb90] sm:$0xf]
    %v2379 = vld [vmem:[#allocation9 + $0xba0] sm:$0xff]
    %v2380 = vld [vmem:[#allocation9 + $0xba8] sm:$0xf]
    %v2381 = vld [vmem:[#allocation9 + $0xbb8] sm:$0xff]
    %v2382 = vld [vmem:[#allocation9 + $0xbc0] sm:$0xf]
    %v2383 = vld [vmem:[#allocation9 + $0xbd0] sm:$0xff]
    %v2384 = vld [vmem:[#allocation9 + $0xbd8] sm:$0xf]
    %v2385 = vld [vmem:[#allocation9 + $0xbe8] sm:$0xff]
    %v2386 = vld [vmem:[#allocation9 + $0xbf0] sm:$0xf]
    %v2387 = vpack.c.bf16 %v2319, %v2317
    %v2388 = vpack.c.bf16 %v2320, %v2318
    %v2389 = vpack.c.bf16 %v2321, %v2321
    %v2390 = vpack.c.bf16 %v2322, %v2322
    %s2391 = scalar_lea.vmem [#allocation10], 1
    %v2392 = vld [vmem:[%s2391] ss:$8 sm:$0x7]
    %v2394 = vlaneseq
    %v2395 = vshrl.u32 %v2394, 7
    %v2396 = vsub.s32 0, %v2395
    %v2397 = vrot.slane %v2392, %v2396
    %v2398 = vlaneseq
    %v2399 = vshrl.u32 %v2398, 7
    %v2400 = vsub.s32 1, %v2399
    %v2401 = vrot.slane %v2392, %v2400
    %v2402 = vlaneseq
    %v2403 = vshrl.u32 %v2402, 7
    %v2404 = vsub.s32 2, %v2403
    %v2405 = vrot.slane %v2392, %v2404
    %v2473 = vunpack.c.l.b16 %v2323
    %v2474 = vunpack.c.h.b16 %v2323
    %v2475 = vunpack.c.l.b16 %v2324
    %v2476 = vunpack.c.l.b16 %v2325
    %v2477 = vunpack.c.h.b16 %v2325
    %v2478 = vunpack.c.l.b16 %v2326
    %v2479 = vunpack.c.l.b16 %v2327
    %v2480 = vunpack.c.h.b16 %v2327
    %v2481 = vunpack.c.l.b16 %v2328
    %v2482 = vunpack.c.l.b16 %v2329
    %v2483 = vunpack.c.h.b16 %v2329
    %v2484 = vunpack.c.l.b16 %v2330
    %v2485 = vunpack.c.l.b16 %v2331
    %v2486 = vunpack.c.h.b16 %v2331
    %v2487 = vunpack.c.l.b16 %v2332
    %v2488 = vunpack.c.l.b16 %v2333
    %v2489 = vunpack.c.h.b16 %v2333
    %v2490 = vunpack.c.l.b16 %v2334
    %v2491 = vunpack.c.l.b16 %v2335
    %v2492 = vunpack.c.h.b16 %v2335
    %v2493 = vunpack.c.l.b16 %v2336
    %v2494 = vunpack.c.l.b16 %v2337
    %v2495 = vunpack.c.h.b16 %v2337
    %v2496 = vunpack.c.l.b16 %v2338
    %v2497 = vunpack.c.l.b16 %v2339
    %v2498 = vunpack.c.h.b16 %v2339
    %v2499 = vunpack.c.l.b16 %v2340
    %v2500 = vunpack.c.l.b16 %v2341
    %v2501 = vunpack.c.h.b16 %v2341
    %v2502 = vunpack.c.l.b16 %v2342
    %v2503 = vunpack.c.l.b16 %v2343
    %v2504 = vunpack.c.h.b16 %v2343
    %v2505 = vunpack.c.l.b16 %v2344
    %v2506 = vunpack.c.l.b16 %v2345
    %v2507 = vunpack.c.h.b16 %v2345
    %v2508 = vunpack.c.l.b16 %v2346
    %v2509 = vunpack.c.l.b16 %v2347
    %v2510 = vunpack.c.h.b16 %v2347
    %v2511 = vunpack.c.l.b16 %v2348
    %v2512 = vunpack.c.l.b16 %v2349
    %v2513 = vunpack.c.h.b16 %v2349
    %v2514 = vunpack.c.l.b16 %v2350
    %v2515 = vunpack.c.l.b16 %v2351
    %v2516 = vunpack.c.h.b16 %v2351
    %v2517 = vunpack.c.l.b16 %v2352
    %v2518 = vunpack.c.l.b16 %v2353
    %v2519 = vunpack.c.h.b16 %v2353
    %v2520 = vunpack.c.l.b16 %v2354
    %v2521 = vunpack.c.l.b16 %v2355
    %v2522 = vunpack.c.h.b16 %v2355
    %v2523 = vunpack.c.l.b16 %v2356
    %v2524 = vunpack.c.l.b16 %v2357
    %v2525 = vunpack.c.h.b16 %v2357
    %v2526 = vunpack.c.l.b16 %v2358
    %v2527 = vunpack.c.l.b16 %v2359
    %v2528 = vunpack.c.h.b16 %v2359
    %v2529 = vunpack.c.l.b16 %v2360
    %v2530 = vunpack.c.l.b16 %v2361
    %v2531 = vunpack.c.h.b16 %v2361
    %v2532 = vunpack.c.l.b16 %v2362
    %v2533 = vunpack.c.l.b16 %v2363
    %v2534 = vunpack.c.h.b16 %v2363
    %v2535 = vunpack.c.l.b16 %v2364
    %v2536 = vunpack.c.l.b16 %v2365
    %v2537 = vunpack.c.h.b16 %v2365
    %v2538 = vunpack.c.l.b16 %v2366
    %v2539 = vunpack.c.l.b16 %v2367
    %v2540 = vunpack.c.h.b16 %v2367
    %v2541 = vunpack.c.l.b16 %v2368
    %v2542 = vunpack.c.l.b16 %v2369
    %v2543 = vunpack.c.h.b16 %v2369
    %v2544 = vunpack.c.l.b16 %v2370
    %v2545 = vunpack.c.l.b16 %v2371
    %v2546 = vunpack.c.h.b16 %v2371
    %v2547 = vunpack.c.l.b16 %v2372
    %v2548 = vunpack.c.l.b16 %v2373
    %v2549 = vunpack.c.h.b16 %v2373
    %v2550 = vunpack.c.l.b16 %v2374
    %v2551 = vunpack.c.l.b16 %v2375
    %v2552 = vunpack.c.h.b16 %v2375
    %v2553 = vunpack.c.l.b16 %v2376
    %v2554 = vunpack.c.l.b16 %v2377
    %v2555 = vunpack.c.h.b16 %v2377
    %v2556 = vunpack.c.l.b16 %v2378
    %v2557 = vunpack.c.l.b16 %v2379
    %v2558 = vunpack.c.h.b16 %v2379
    %v2559 = vunpack.c.l.b16 %v2380
    %v2560 = vunpack.c.l.b16 %v2381
    %v2561 = vunpack.c.h.b16 %v2381
    %v2562 = vunpack.c.l.b16 %v2382
    %v2563 = vunpack.c.l.b16 %v2383
    %v2564 = vunpack.c.h.b16 %v2383
    %v2565 = vunpack.c.l.b16 %v2384
    %v2566 = vunpack.c.l.b16 %v2385
    %v2567 = vunpack.c.h.b16 %v2385
    %v2568 = vunpack.c.l.b16 %v2386
    %v2569 = vpack.c.b16 %v2476, %v2473
    %v2570 = vpack.c.b16 %v2477, %v2474
    %v2571 = vpack.c.b16 %v2478, %v2475
    %v2572 = vpack.c.b16 %v2482, %v2479
    %v2573 = vpack.c.b16 %v2483, %v2480
    %v2574 = vpack.c.b16 %v2484, %v2481
    %v2575 = vpack.c.b16 %v2488, %v2485
    %v2576 = vpack.c.b16 %v2489, %v2486
    %v2577 = vpack.c.b16 %v2490, %v2487
    %v2578 = vpack.c.b16 %v2494, %v2491
    %v2579 = vpack.c.b16 %v2495, %v2492
    %v2580 = vpack.c.b16 %v2496, %v2493
    %v2581 = vpack.c.b16 %v2500, %v2497
    %v2582 = vpack.c.b16 %v2501, %v2498
    %v2583 = vpack.c.b16 %v2502, %v2499
    %v2584 = vpack.c.b16 %v2506, %v2503
    %v2585 = vpack.c.b16 %v2507, %v2504
    %v2586 = vpack.c.b16 %v2508, %v2505
    %v2587 = vpack.c.b16 %v2512, %v2509
    %v2588 = vpack.c.b16 %v2513, %v2510
    %v2589 = vpack.c.b16 %v2514, %v2511
    %v2590 = vpack.c.b16 %v2518, %v2515
    %v2591 = vpack.c.b16 %v2519, %v2516
    %v2592 = vpack.c.b16 %v2520, %v2517
    %v2593 = vpack.c.b16 %v2524, %v2521
    %v2594 = vpack.c.b16 %v2525, %v2522
    %v2595 = vpack.c.b16 %v2526, %v2523
    %v2596 = vpack.c.b16 %v2530, %v2527
    %v2597 = vpack.c.b16 %v2531, %v2528
    %v2598 = vpack.c.b16 %v2532, %v2529
    %v2599 = vpack.c.b16 %v2536, %v2533
    %v2600 = vpack.c.b16 %v2537, %v2534
    %v2601 = vpack.c.b16 %v2538, %v2535
    %v2602 = vpack.c.b16 %v2542, %v2539
    %v2603 = vpack.c.b16 %v2543, %v2540
    %v2604 = vpack.c.b16 %v2544, %v2541
    %v2605 = vpack.c.b16 %v2548, %v2545
    %v2606 = vpack.c.b16 %v2549, %v2546
    %v2607 = vpack.c.b16 %v2550, %v2547
    %v2608 = vpack.c.b16 %v2554, %v2551
    %v2609 = vpack.c.b16 %v2555, %v2552
    %v2610 = vpack.c.b16 %v2556, %v2553
    %v2611 = vpack.c.b16 %v2560, %v2557
    %v2612 = vpack.c.b16 %v2561, %v2558
    %v2613 = vpack.c.b16 %v2562, %v2559
    %v2614 = vpack.c.b16 %v2566, %v2563
    %v2615 = vpack.c.b16 %v2567, %v2564
    %v2616 = vpack.c.b16 %v2568, %v2565
    %2665 = vmatprep.subr.bf16.mxu0 %v2591
    %2666 = vmatpush1.bf16.msra.mxu0 %v2590
    %2667 = vmatprep.subr.bf16.mxu0 %v2588
    %2668 = vmatpush1.bf16.msra.mxu0 %v2587
    %2669 = vmatprep.subr.bf16.mxu0 %v2585
    %2670 = vmatpush1.bf16.msra.mxu0 %v2584
    %2671 = vmatprep.subr.bf16.mxu0 %v2582
    %2672 = vmatpush1.bf16.msra.mxu0 %v2581
    %2673 = vmatprep.subr.bf16.mxu0 %v2579
    %2674 = vmatpush1.bf16.msra.mxu0 %v2578
    %2675 = vmatprep.subr.bf16.mxu0 %v2576
    %2676 = vmatpush1.bf16.msra.mxu0 %v2575
    %2677 = vmatprep.subr.bf16.mxu0 %v2573
    %2678 = vmatpush1.bf16.msra.mxu0 %v2572
    %2679 = vmatprep.subr.bf16.mxu0 %v2570
    %2680 = vmatpush1.bf16.msra.mxu0 %v2569
    %2681 = vmatprep.subr.bf16.mxu0 %v2615
    %2682 = vmatpush2.bf16.msra.mxu0 %v2614
    %2683 = vmatprep.subr.bf16.mxu0 %v2612
    %2684 = vmatpush2.bf16.msra.mxu0 %v2611
    %2685 = vmatprep.subr.bf16.mxu0 %v2609
    %2686 = vmatpush2.bf16.msra.mxu0 %v2608
    %2687 = vmatprep.subr.bf16.mxu0 %v2606
    %2688 = vmatpush2.bf16.msra.mxu0 %v2605
    %2689 = vmatprep.subr.bf16.mxu0 %v2603
    %2690 = vmatpush2.bf16.msra.mxu0 %v2602
    %2691 = vmatprep.subr.bf16.mxu0 %v2600
    %2692 = vmatpush2.bf16.msra.mxu0 %v2599
    %2693 = vmatprep.subr.bf16.mxu0 %v2597
    %2694 = vmatpush2.bf16.msra.mxu0 %v2596
    %2695 = vmatprep.subr.bf16.mxu0 %v2594
    %2696 = vmatpush2.bf16.msra.mxu0 %v2593
    %2697 = vmatprep.mubr.bf16.mxu0 %v2388
    %2698 = vmatmul.mubr.bf16.gmra.mxu0 %v2387
    %v2699 = vpop.f32.mrf.mxu0
    %v2700 = vadd.f32 %v2397, %v2699
    %v2701 = vpop.f32.mrf.mxu0
    %v2702 = vpop.f32.mrf.mxu0
    %v2703 = vpop.f32.mrf.mxu0
    %v2704 = vadd.f32 %v2401, %v2703
    %2705 = vmatprep.mubr.bf16.mxu0 %v2390
    %2706 = vmatmul.mubr.bf16.gmra.mxu0 %v2389
    %v2707 = vpop.f32.mrf.mxu0
    %v2708 = vpop.f32.mrf.mxu0
    %v2709 = vpop.f32.mrf.mxu0
    %v2710 = vpop.f32.mrf.mxu0
    %2711 = vdwg.mxu0
    %2712 = vmatprep.subr.bf16.mxu0 0
    %2713 = vmatpush1.bf16.msra.mxu0 %v2592
    %2714 = vmatprep.subr.bf16.mxu0 0
    %2715 = vmatpush1.bf16.msra.mxu0 %v2589
    %2716 = vmatprep.subr.bf16.mxu0 0
    %2717 = vmatpush1.bf16.msra.mxu0 %v2586
    %2718 = vmatprep.subr.bf16.mxu0 0
    %2719 = vmatpush1.bf16.msra.mxu0 %v2583
    %2720 = vmatprep.subr.bf16.mxu0 0
    %2721 = vmatpush1.bf16.msra.mxu0 %v2580
    %2722 = vmatprep.subr.bf16.mxu0 0
    %2723 = vmatpush1.bf16.msra.mxu0 %v2577
    %2724 = vmatprep.subr.bf16.mxu0 0
    %2725 = vmatpush1.bf16.msra.mxu0 %v2574
    %2726 = vmatprep.subr.bf16.mxu0 0
    %2727 = vmatpush1.bf16.msra.mxu0 %v2571
    %2728 = vmatprep.subr.bf16.mxu0 0
    %2729 = vmatpush2.bf16.msra.mxu0 %v2616
    %2730 = vmatprep.subr.bf16.mxu0 0
    %2731 = vmatpush2.bf16.msra.mxu0 %v2613
    %2732 = vmatprep.subr.bf16.mxu0 0
    %2733 = vmatpush2.bf16.msra.mxu0 %v2610
    %2734 = vmatprep.subr.bf16.mxu0 0
    %2735 = vmatpush2.bf16.msra.mxu0 %v2607
    %2736 = vmatprep.subr.bf16.mxu0 0
    %2737 = vmatpush2.bf16.msra.mxu0 %v2604
    %2738 = vmatprep.subr.bf16.mxu0 0
    %2739 = vmatpush2.bf16.msra.mxu0 %v2601
    %2740 = vmatprep.subr.bf16.mxu0 0
    %2741 = vmatpush2.bf16.msra.mxu0 %v2598
    %2742 = vmatprep.subr.bf16.mxu0 0
    %2743 = vmatpush2.bf16.msra.mxu0 %v2595
    %2744 = vmatprep.mubr.bf16.mxu0 %v2388
    %2745 = vmatmul.mubr.bf16.gmra.mxu0 %v2387
    %v2746 = vpop.f32.mrf.mxu0
    %v2747 = vpop.f32.mrf.mxu0
    %v2748 = vpop.f32.mrf.mxu0
    %v2749 = vpop.f32.mrf.mxu0
    %2750 = vmatprep.mubr.bf16.mxu0 %v2390
    %2751 = vmatmul.mubr.bf16.gmra.mxu0 %v2389
    %v2752 = vpop.f32.mrf.mxu0
    %v2753 = vadd.f32 %v2405, %v2752
    %v2754 = vpop.f32.mrf.mxu0
    %v2755 = vpop.f32.mrf.mxu0
    %v2756 = vpop.f32.mrf.mxu0
    %2757 = vdwg.mxu0
    %v2758 = vmax.f32 %v2700, 0.0
    %v2759 = vmax.f32 %v2704, 0.0
    %v2760 = vmax.f32 %v2753, 0.0
    %v2761 = vld [vmem:[#allocation9 + $0x90c] sm:$0xf]
    %v2762 = vld [vmem:[#allocation9 + $0x924] sm:$0xf]
    %v2763 = vld [vmem:[#allocation9 + $0x93c] sm:$0xf]
    %v2764 = vld [vmem:[#allocation9 + $0x954] sm:$0xf]
    %v2765 = vld [vmem:[#allocation9 + $0x96c] sm:$0xf]
    %v2766 = vld [vmem:[#allocation9 + $0x984] sm:$0xf]
    %v2767 = vld [vmem:[#allocation9 + $0x99c] sm:$0xf]
    %v2768 = vld [vmem:[#allocation9 + $0x9b4] sm:$0xf]
    %v2769 = vld [vmem:[#allocation9 + $0x9cc] sm:$0xf]
    %v2770 = vld [vmem:[#allocation9 + $0x9e4] sm:$0xf]
    %v2771 = vld [vmem:[#allocation9 + $0x9fc] sm:$0xf]
    %v2772 = vld [vmem:[#allocation9 + $0xa14] sm:$0xf]
    %v2773 = vld [vmem:[#allocation9 + $0xa2c] sm:$0xf]
    %v2774 = vld [vmem:[#allocation9 + $0xa44] sm:$0xf]
    %v2775 = vld [vmem:[#allocation9 + $0xa5c] sm:$0xf]
    %v2776 = vld [vmem:[#allocation9 + $0xa74] sm:$0xf]
    %v2777 = vld [vmem:[#allocation9 + $0xa8c] sm:$0xf]
    %v2778 = vld [vmem:[#allocation9 + $0xaa4] sm:$0xf]
    %v2779 = vld [vmem:[#allocation9 + $0xabc] sm:$0xf]
    %v2780 = vld [vmem:[#allocation9 + $0xad4] sm:$0xf]
    %v2781 = vld [vmem:[#allocation9 + $0xaec] sm:$0xf]
    %v2782 = vld [vmem:[#allocation9 + $0xb04] sm:$0xf]
    %v2783 = vld [vmem:[#allocation9 + $0xb1c] sm:$0xf]
    %v2784 = vld [vmem:[#allocation9 + $0xb34] sm:$0xf]
    %v2785 = vld [vmem:[#allocation9 + $0xb4c] sm:$0xf]
    %v2786 = vld [vmem:[#allocation9 + $0xb64] sm:$0xf]
    %v2787 = vld [vmem:[#allocation9 + $0xb7c] sm:$0xf]
    %v2788 = vld [vmem:[#allocation9 + $0xb94] sm:$0xf]
    %v2789 = vld [vmem:[#allocation9 + $0xbac] sm:$0xf]
    %v2790 = vld [vmem:[#allocation9 + $0xbc4] sm:$0xf]
    %v2791 = vld [vmem:[#allocation9 + $0xbdc] sm:$0xf]
    %v2792 = vld [vmem:[#allocation9 + $0xbf4] sm:$0xf]
    %v2793 = vpack.c.bf16 %v2758, %v2758
    %v2794 = vpack.c.bf16 %v2759, %v2759
    %v2795 = vld [vmem:[#allocation10 + $0x19] ss:$0 sm:$0xff]
    %v2828 = vunpack.c.l.b16 %v2761
    %v2829 = vunpack.c.l.b16 %v2762
    %v2830 = vunpack.c.l.b16 %v2763
    %v2831 = vunpack.c.l.b16 %v2764
    %v2832 = vunpack.c.l.b16 %v2765
    %v2833 = vunpack.c.l.b16 %v2766
    %v2834 = vunpack.c.l.b16 %v2767
    %v2835 = vunpack.c.l.b16 %v2768
    %v2836 = vunpack.c.l.b16 %v2769
    %v2837 = vunpack.c.l.b16 %v2770
    %v2838 = vunpack.c.l.b16 %v2771
    %v2839 = vunpack.c.l.b16 %v2772
    %v2840 = vunpack.c.l.b16 %v2773
    %v2841 = vunpack.c.l.b16 %v2774
    %v2842 = vunpack.c.l.b16 %v2775
    %v2843 = vunpack.c.l.b16 %v2776
    %v2844 = vunpack.c.l.b16 %v2777
    %v2845 = vunpack.c.l.b16 %v2778
    %v2846 = vunpack.c.l.b16 %v2779
    %v2847 = vunpack.c.l.b16 %v2780
    %v2848 = vunpack.c.l.b16 %v2781
    %v2849 = vunpack.c.l.b16 %v2782
    %v2850 = vunpack.c.l.b16 %v2783
    %v2851 = vunpack.c.l.b16 %v2784
    %v2852 = vunpack.c.l.b16 %v2785
    %v2853 = vunpack.c.l.b16 %v2786
    %v2854 = vunpack.c.l.b16 %v2787
    %v2855 = vunpack.c.l.b16 %v2788
    %v2856 = vunpack.c.l.b16 %v2789
    %v2857 = vunpack.c.l.b16 %v2790
    %v2858 = vunpack.c.l.b16 %v2791
    %v2859 = vunpack.c.l.b16 %v2792
    %v2860 = vpack.c.b16 %v2829, %v2828
    %v2861 = vpack.c.b16 %v2831, %v2830
    %v2862 = vpack.c.b16 %v2833, %v2832
    %v2863 = vpack.c.b16 %v2835, %v2834
    %v2864 = vpack.c.b16 %v2837, %v2836
    %v2865 = vpack.c.b16 %v2839, %v2838
    %v2866 = vpack.c.b16 %v2841, %v2840
    %v2867 = vpack.c.b16 %v2843, %v2842
    %v2868 = vpack.c.b16 %v2845, %v2844
    %v2869 = vpack.c.b16 %v2847, %v2846
    %v2870 = vpack.c.b16 %v2849, %v2848
    %v2871 = vpack.c.b16 %v2851, %v2850
    %v2872 = vpack.c.b16 %v2853, %v2852
    %v2873 = vpack.c.b16 %v2855, %v2854
    %v2874 = vpack.c.b16 %v2857, %v2856
    %v2875 = vpack.c.b16 %v2859, %v2858
    %2892 = vmatprep.subr.bf16.mxu0 0
    %2893 = vmatpush1.bf16.msra.mxu0 %v2867
    %2894 = vmatprep.subr.bf16.mxu0 0
    %2895 = vmatpush1.bf16.msra.mxu0 %v2866
    %2896 = vmatprep.subr.bf16.mxu0 0
    %2897 = vmatpush1.bf16.msra.mxu0 %v2865
    %2898 = vmatprep.subr.bf16.mxu0 0
    %2899 = vmatpush1.bf16.msra.mxu0 %v2864
    %2900 = vmatprep.subr.bf16.mxu0 0
    %2901 = vmatpush1.bf16.msra.mxu0 %v2863
    %2902 = vmatprep.subr.bf16.mxu0 0
    %2903 = vmatpush1.bf16.msra.mxu0 %v2862
    %2904 = vmatprep.subr.bf16.mxu0 0
    %2905 = vmatpush1.bf16.msra.mxu0 %v2861
    %2906 = vmatprep.subr.bf16.mxu0 0
    %2907 = vmatpush1.bf16.msra.mxu0 %v2860
    %2908 = vmatprep.subr.bf16.mxu0 0
    %2909 = vmatpush2.bf16.msra.mxu0 %v2875
    %2910 = vmatprep.subr.bf16.mxu0 0
    %2911 = vmatpush2.bf16.msra.mxu0 %v2874
    %2912 = vmatprep.subr.bf16.mxu0 0
    %2913 = vmatpush2.bf16.msra.mxu0 %v2873
    %2914 = vmatprep.subr.bf16.mxu0 0
    %2915 = vmatpush2.bf16.msra.mxu0 %v2872
    %2916 = vmatprep.subr.bf16.mxu0 0
    %2917 = vmatpush2.bf16.msra.mxu0 %v2871
    %2918 = vmatprep.subr.bf16.mxu0 0
    %2919 = vmatpush2.bf16.msra.mxu0 %v2870
    %2920 = vmatprep.subr.bf16.mxu0 0
    %2921 = vmatpush2.bf16.msra.mxu0 %v2869
    %2922 = vmatprep.subr.bf16.mxu0 0
    %2923 = vmatpush2.bf16.msra.mxu0 %v2868
    %2924 = vmatprep.mubr.bf16.mxu0 %v2794
    %2925 = vmatmul.mubr.bf16.gmra.mxu0 %v2793
    %v2926 = vpop.f32.mrf.mxu0
    %v2927 = vadd.f32 %v2795, %v2926
    %v2928 = vpop.f32.mrf.mxu0
    %v2929 = vpop.f32.mrf.mxu0
    %v2930 = vpop.f32.mrf.mxu0
    %2931 = vdwg.mxu0
    %v2932 = vmax.f32 %v2927, 0.0
    %v2933 = vld [vmem:[#allocation9 + $0x910] sm:$0xf]
    %v2934 = vld [vmem:[#allocation9 + $0x928] sm:$0xf]
    %v2935 = vld [vmem:[#allocation9 + $0x940] sm:$0xf]
    %v2936 = vld [vmem:[#allocation9 + $0x958] sm:$0xf]
    %v2937 = vld [vmem:[#allocation9 + $0x970] sm:$0xf]
    %v2938 = vld [vmem:[#allocation9 + $0x988] sm:$0xf]
    %v2939 = vld [vmem:[#allocation9 + $0x9a0] sm:$0xf]
    %v2940 = vld [vmem:[#allocation9 + $0x9b8] sm:$0xf]
    %v2941 = vld [vmem:[#allocation9 + $0x9d0] sm:$0xf]
    %v2942 = vld [vmem:[#allocation9 + $0x9e8] sm:$0xf]
    %v2943 = vld [vmem:[#allocation9 + $0xa00] sm:$0xf]
    %v2944 = vld [vmem:[#allocation9 + $0xa18] sm:$0xf]
    %v2945 = vld [vmem:[#allocation9 + $0xa30] sm:$0xf]
    %v2946 = vld [vmem:[#allocation9 + $0xa48] sm:$0xf]
    %v2947 = vld [vmem:[#allocation9 + $0xa60] sm:$0xf]
    %v2948 = vld [vmem:[#allocation9 + $0xa78] sm:$0xf]
    %v2949 = vld [vmem:[#allocation9 + $0xa90] sm:$0xf]
    %v2950 = vld [vmem:[#allocation9 + $0xaa8] sm:$0xf]
    %v2951 = vld [vmem:[#allocation9 + $0xac0] sm:$0xf]
    %v2952 = vld [vmem:[#allocation9 + $0xad8] sm:$0xf]
    %v2953 = vld [vmem:[#allocation9 + $0xaf0] sm:$0xf]
    %v2954 = vld [vmem:[#allocation9 + $0xb08] sm:$0xf]
    %v2955 = vld [vmem:[#allocation9 + $0xb20] sm:$0xf]
    %v2956 = vld [vmem:[#allocation9 + $0xb38] sm:$0xf]
    %v2957 = vld [vmem:[#allocation9 + $0xb50] sm:$0xf]
    %v2958 = vld [vmem:[#allocation9 + $0xb68] sm:$0xf]
    %v2959 = vld [vmem:[#allocation9 + $0xb80] sm:$0xf]
    %v2960 = vld [vmem:[#allocation9 + $0xb98] sm:$0xf]
    %v2961 = vld [vmem:[#allocation9 + $0xbb0] sm:$0xf]
    %v2962 = vld [vmem:[#allocation9 + $0xbc8] sm:$0xf]
    %v2963 = vld [vmem:[#allocation9 + $0xbe0] sm:$0xf]
    %v2964 = vld [vmem:[#allocation9 + $0xbf8] sm:$0xf]
    %v2965 = vpack.c.bf16 %v2932, %v2932
    %v2966 = vpack.c.bf16 %v2760, %v2760
    %v2967 = vld [vmem:[#allocation10 + $0x21] ss:$0 sm:$0xff]
    %v3000 = vunpack.c.l.b16 %v2933
    %v3001 = vunpack.c.l.b16 %v2934
    %v3002 = vunpack.c.l.b16 %v2935
    %v3003 = vunpack.c.l.b16 %v2936
    %v3004 = vunpack.c.l.b16 %v2937
    %v3005 = vunpack.c.l.b16 %v2938
    %v3006 = vunpack.c.l.b16 %v2939
    %v3007 = vunpack.c.l.b16 %v2940
    %v3008 = vunpack.c.l.b16 %v2941
    %v3009 = vunpack.c.l.b16 %v2942
    %v3010 = vunpack.c.l.b16 %v2943
    %v3011 = vunpack.c.l.b16 %v2944
    %v3012 = vunpack.c.l.b16 %v2945
    %v3013 = vunpack.c.l.b16 %v2946
    %v3014 = vunpack.c.l.b16 %v2947
    %v3015 = vunpack.c.l.b16 %v2948
    %v3016 = vunpack.c.l.b16 %v2949
    %v3017 = vunpack.c.l.b16 %v2950
    %v3018 = vunpack.c.l.b16 %v2951
    %v3019 = vunpack.c.l.b16 %v2952
    %v3020 = vunpack.c.l.b16 %v2953
    %v3021 = vunpack.c.l.b16 %v2954
    %v3022 = vunpack.c.l.b16 %v2955
    %v3023 = vunpack.c.l.b16 %v2956
    %v3024 = vunpack.c.l.b16 %v2957
    %v3025 = vunpack.c.l.b16 %v2958
    %v3026 = vunpack.c.l.b16 %v2959
    %v3027 = vunpack.c.l.b16 %v2960
    %v3028 = vunpack.c.l.b16 %v2961
    %v3029 = vunpack.c.l.b16 %v2962
    %v3030 = vunpack.c.l.b16 %v2963
    %v3031 = vunpack.c.l.b16 %v2964
    %v3032 = vpack.c.b16 %v3001, %v3000
    %v3033 = vpack.c.b16 %v3003, %v3002
    %v3034 = vpack.c.b16 %v3005, %v3004
    %v3035 = vpack.c.b16 %v3007, %v3006
    %v3036 = vpack.c.b16 %v3009, %v3008
    %v3037 = vpack.c.b16 %v3011, %v3010
    %v3038 = vpack.c.b16 %v3013, %v3012
    %v3039 = vpack.c.b16 %v3015, %v3014
    %v3040 = vpack.c.b16 %v3017, %v3016
    %v3041 = vpack.c.b16 %v3019, %v3018
    %v3042 = vpack.c.b16 %v3021, %v3020
    %v3043 = vpack.c.b16 %v3023, %v3022
    %v3044 = vpack.c.b16 %v3025, %v3024
    %v3045 = vpack.c.b16 %v3027, %v3026
    %v3046 = vpack.c.b16 %v3029, %v3028
    %v3047 = vpack.c.b16 %v3031, %v3030
    %3064 = vmatprep.subr.bf16.mxu0 0
    %3065 = vmatpush1.bf16.msra.mxu0 %v3039
    %3066 = vmatprep.subr.bf16.mxu0 0
    %3067 = vmatpush1.bf16.msra.mxu0 %v3038
    %3068 = vmatprep.subr.bf16.mxu0 0
    %3069 = vmatpush1.bf16.msra.mxu0 %v3037
    %3070 = vmatprep.subr.bf16.mxu0 0
    %3071 = vmatpush1.bf16.msra.mxu0 %v3036
    %3072 = vmatprep.subr.bf16.mxu0 0
    %3073 = vmatpush1.bf16.msra.mxu0 %v3035
    %3074 = vmatprep.subr.bf16.mxu0 0
    %3075 = vmatpush1.bf16.msra.mxu0 %v3034
    %3076 = vmatprep.subr.bf16.mxu0 0
    %3077 = vmatpush1.bf16.msra.mxu0 %v3033
    %3078 = vmatprep.subr.bf16.mxu0 0
    %3079 = vmatpush1.bf16.msra.mxu0 %v3032
    %3080 = vmatprep.subr.bf16.mxu0 0
    %3081 = vmatpush2.bf16.msra.mxu0 %v3047
    %3082 = vmatprep.subr.bf16.mxu0 0
    %3083 = vmatpush2.bf16.msra.mxu0 %v3046
    %3084 = vmatprep.subr.bf16.mxu0 0
    %3085 = vmatpush2.bf16.msra.mxu0 %v3045
    %3086 = vmatprep.subr.bf16.mxu0 0
    %3087 = vmatpush2.bf16.msra.mxu0 %v3044
    %3088 = vmatprep.subr.bf16.mxu0 0
    %3089 = vmatpush2.bf16.msra.mxu0 %v3043
    %3090 = vmatprep.subr.bf16.mxu0 0
    %3091 = vmatpush2.bf16.msra.mxu0 %v3042
    %3092 = vmatprep.subr.bf16.mxu0 0
    %3093 = vmatpush2.bf16.msra.mxu0 %v3041
    %3094 = vmatprep.subr.bf16.mxu0 0
    %3095 = vmatpush2.bf16.msra.mxu0 %v3040
    %3096 = vmatprep.mubr.bf16.mxu0 %v2966
    %3097 = vmatmul.mubr.bf16.gmra.mxu0 %v2965
    %v3098 = vpop.f32.mrf.mxu0
    %v3099 = vadd.f32 %v2967, %v3098
    %v3100 = vpop.f32.mrf.mxu0
    %v3101 = vpop.f32.mrf.mxu0
    %v3102 = vpop.f32.mrf.mxu0
    %3103 = vdwg.mxu0
    %v3104 = vmax.f32 %v3099, 0.0
    %v3105 = vld [vmem:[#allocation9 + $0xc00] sm:$0xf]
    %v3106 = vld [vmem:[#allocation9 + $0xc18] sm:$0xf]
    %v3107 = vld [vmem:[#allocation9 + $0xc30] sm:$0xf]
    %v3108 = vld [vmem:[#allocation9 + $0xc48] sm:$0xf]
    %v3109 = vld [vmem:[#allocation9 + $0xc60] sm:$0xf]
    %v3110 = vld [vmem:[#allocation9 + $0xc78] sm:$0xf]
    %v3111 = vld [vmem:[#allocation9 + $0xc90] sm:$0xf]
    %v3112 = vld [vmem:[#allocation9 + $0xca8] sm:$0xf]
    %v3113 = vld [vmem:[#allocation9 + $0xcc0] sm:$0xf]
    %v3114 = vld [vmem:[#allocation9 + $0xcd8] sm:$0xf]
    %v3115 = vld [vmem:[#allocation9 + $0xcf0] sm:$0xf]
    %v3116 = vld [vmem:[#allocation9 + $0xd08] sm:$0xf]
    %v3117 = vld [vmem:[#allocation9 + $0xd20] sm:$0xf]
    %v3118 = vld [vmem:[#allocation9 + $0xd38] sm:$0xf]
    %v3119 = vld [vmem:[#allocation9 + $0xd50] sm:$0xf]
    %v3120 = vld [vmem:[#allocation9 + $0xd68] sm:$0xf]
    %v3121 = vpack.c.bf16 %v3104, %v3104
    %v3122 = vld [vmem:[#allocation10 + $0x2] ss:$0 sm:$0xff]
    %v3139 = vunpack.c.l.b16 %v3105
    %v3140 = vunpack.c.l.b16 %v3106
    %v3141 = vunpack.c.l.b16 %v3107
    %v3142 = vunpack.c.l.b16 %v3108
    %v3143 = vunpack.c.l.b16 %v3109
    %v3144 = vunpack.c.l.b16 %v3110
    %v3145 = vunpack.c.l.b16 %v3111
    %v3146 = vunpack.c.l.b16 %v3112
    %v3147 = vunpack.c.l.b16 %v3113
    %v3148 = vunpack.c.l.b16 %v3114
    %v3149 = vunpack.c.l.b16 %v3115
    %v3150 = vunpack.c.l.b16 %v3116
    %v3151 = vunpack.c.l.b16 %v3117
    %v3152 = vunpack.c.l.b16 %v3118
    %v3153 = vunpack.c.l.b16 %v3119
    %v3154 = vunpack.c.l.b16 %v3120
    %v3155 = vpack.c.b16 %v3140, %v3139
    %v3156 = vpack.c.b16 %v3142, %v3141
    %v3157 = vpack.c.b16 %v3144, %v3143
    %v3158 = vpack.c.b16 %v3146, %v3145
    %v3159 = vpack.c.b16 %v3148, %v3147
    %v3160 = vpack.c.b16 %v3150, %v3149
    %v3161 = vpack.c.b16 %v3152, %v3151
    %v3162 = vpack.c.b16 %v3154, %v3153
    %3171 = vmatprep.subr.bf16.mxu0 0
    %3172 = vmatpush1.bf16.msra.mxu0 %v3162
    %3173 = vmatprep.subr.bf16.mxu0 0
    %3174 = vmatpush1.bf16.msra.mxu0 %v3161
    %3175 = vmatprep.subr.bf16.mxu0 0
    %3176 = vmatpush1.bf16.msra.mxu0 %v3160
    %3177 = vmatprep.subr.bf16.mxu0 0
    %3178 = vmatpush1.bf16.msra.mxu0 %v3159
    %3179 = vmatprep.subr.bf16.mxu0 0
    %3180 = vmatpush1.bf16.msra.mxu0 %v3158
    %3181 = vmatprep.subr.bf16.mxu0 0
    %3182 = vmatpush1.bf16.msra.mxu0 %v3157
    %3183 = vmatprep.subr.bf16.mxu0 0
    %3184 = vmatpush1.bf16.msra.mxu0 %v3156
    %3185 = vmatprep.subr.bf16.mxu0 0
    %3186 = vmatpush1.bf16.msra.mxu0 %v3155
    %3187 = vmatprep.subr.bf16.mxu0 0
    %3188 = vmatpush2.bf16.msra.mxu0 0
    %3189 = vmatprep.subr.bf16.mxu0 0
    %3190 = vmatpush2.bf16.msra.mxu0 0
    %3191 = vmatprep.subr.bf16.mxu0 0
    %3192 = vmatpush2.bf16.msra.mxu0 0
    %3193 = vmatprep.subr.bf16.mxu0 0
    %3194 = vmatpush2.bf16.msra.mxu0 0
    %3195 = vmatprep.subr.bf16.mxu0 0
    %3196 = vmatpush2.bf16.msra.mxu0 0
    %3197 = vmatprep.subr.bf16.mxu0 0
    %3198 = vmatpush2.bf16.msra.mxu0 0
    %3199 = vmatprep.subr.bf16.mxu0 0
    %3200 = vmatpush2.bf16.msra.mxu0 0
    %3201 = vmatprep.subr.bf16.mxu0 0
    %3202 = vmatpush2.bf16.msra.mxu0 0
    %3203 = vmatprep.mubr.bf16.mxu0 0
    %3204 = vmatmul.mubr.bf16.gmra.mxu0 %v3121
    %v3205 = vpop.f32.mrf.mxu0
    %v3206 = vadd.f32 %v3122, %v3205
    %v3207 = vpop.f32.mrf.mxu0
    %v3208 = vpop.f32.mrf.mxu0
    %v3209 = vpop.f32.mrf.mxu0
    %3210 = vdwg.mxu0
    %v3211 = vmax.f32 %v3206, 0.0
    %v3212 = vld [vmem:[#allocation9 + $0xc04] sm:$0xf]
    %v3213 = vld [vmem:[#allocation9 + $0xc1c] sm:$0xf]
    %v3214 = vld [vmem:[#allocation9 + $0xc34] sm:$0xf]
    %v3215 = vld [vmem:[#allocation9 + $0xc4c] sm:$0xf]
    %v3216 = vld [vmem:[#allocation9 + $0xc64] sm:$0xf]
    %v3217 = vld [vmem:[#allocation9 + $0xc7c] sm:$0xf]
    %v3218 = vld [vmem:[#allocation9 + $0xc94] sm:$0xf]
    %v3219 = vld [vmem:[#allocation9 + $0xcac] sm:$0xf]
    %v3220 = vld [vmem:[#allocation9 + $0xcc4] sm:$0xf]
    %v3221 = vld [vmem:[#allocation9 + $0xcdc] sm:$0xf]
    %v3222 = vld [vmem:[#allocation9 + $0xcf4] sm:$0xf]
    %v3223 = vld [vmem:[#allocation9 + $0xd0c] sm:$0xf]
    %v3224 = vld [vmem:[#allocation9 + $0xd24] sm:$0xf]
    %v3225 = vld [vmem:[#allocation9 + $0xd3c] sm:$0xf]
    %v3226 = vld [vmem:[#allocation9 + $0xd54] sm:$0xf]
    %v3227 = vld [vmem:[#allocation9 + $0xd6c] sm:$0xf]
    %v3228 = vpack.c.bf16 %v3211, %v3211
    %v3229 = vld [vmem:[#allocation10 + $0xa] ss:$0 sm:$0xff]
    %v3246 = vunpack.c.l.b16 %v3212
    %v3247 = vunpack.c.l.b16 %v3213
    %v3248 = vunpack.c.l.b16 %v3214
    %v3249 = vunpack.c.l.b16 %v3215
    %v3250 = vunpack.c.l.b16 %v3216
    %v3251 = vunpack.c.l.b16 %v3217
    %v3252 = vunpack.c.l.b16 %v3218
    %v3253 = vunpack.c.l.b16 %v3219
    %v3254 = vunpack.c.l.b16 %v3220
    %v3255 = vunpack.c.l.b16 %v3221
    %v3256 = vunpack.c.l.b16 %v3222
    %v3257 = vunpack.c.l.b16 %v3223
    %v3258 = vunpack.c.l.b16 %v3224
    %v3259 = vunpack.c.l.b16 %v3225
    %v3260 = vunpack.c.l.b16 %v3226
    %v3261 = vunpack.c.l.b16 %v3227
    %v3262 = vpack.c.b16 %v3247, %v3246
    %v3263 = vpack.c.b16 %v3249, %v3248
    %v3264 = vpack.c.b16 %v3251, %v3250
    %v3265 = vpack.c.b16 %v3253, %v3252
    %v3266 = vpack.c.b16 %v3255, %v3254
    %v3267 = vpack.c.b16 %v3257, %v3256
    %v3268 = vpack.c.b16 %v3259, %v3258
    %v3269 = vpack.c.b16 %v3261, %v3260
    %3278 = vmatprep.subr.bf16.mxu0 0
    %3279 = vmatpush1.bf16.msra.mxu0 %v3269
    %3280 = vmatprep.subr.bf16.mxu0 0
    %3281 = vmatpush1.bf16.msra.mxu0 %v3268
    %3282 = vmatprep.subr.bf16.mxu0 0
    %3283 = vmatpush1.bf16.msra.mxu0 %v3267
    %3284 = vmatprep.subr.bf16.mxu0 0
    %3285 = vmatpush1.bf16.msra.mxu0 %v3266
    %3286 = vmatprep.subr.bf16.mxu0 0
    %3287 = vmatpush1.bf16.msra.mxu0 %v3265
    %3288 = vmatprep.subr.bf16.mxu0 0
    %3289 = vmatpush1.bf16.msra.mxu0 %v3264
    %3290 = vmatprep.subr.bf16.mxu0 0
    %3291 = vmatpush1.bf16.msra.mxu0 %v3263
    %3292 = vmatprep.subr.bf16.mxu0 0
    %3293 = vmatpush1.bf16.msra.mxu0 %v3262
    %3294 = vmatprep.subr.bf16.mxu0 0
    %3295 = vmatpush2.bf16.msra.mxu0 0
    %3296 = vmatprep.subr.bf16.mxu0 0
    %3297 = vmatpush2.bf16.msra.mxu0 0
    %3298 = vmatprep.subr.bf16.mxu0 0
    %3299 = vmatpush2.bf16.msra.mxu0 0
    %3300 = vmatprep.subr.bf16.mxu0 0
    %3301 = vmatpush2.bf16.msra.mxu0 0
    %3302 = vmatprep.subr.bf16.mxu0 0
    %3303 = vmatpush2.bf16.msra.mxu0 0
    %3304 = vmatprep.subr.bf16.mxu0 0
    %3305 = vmatpush2.bf16.msra.mxu0 0
    %3306 = vmatprep.subr.bf16.mxu0 0
    %3307 = vmatpush2.bf16.msra.mxu0 0
    %3308 = vmatprep.subr.bf16.mxu0 0
    %3309 = vmatpush2.bf16.msra.mxu0 0
    %3310 = vmatprep.mubr.bf16.mxu0 0
    %3311 = vmatmul.mubr.bf16.gmra.mxu0 %v3228
    %v3312 = vpop.f32.mrf.mxu0
    %v3313 = vadd.f32 %v3229, %v3312
    %v3314 = vpop.f32.mrf.mxu0
    %v3315 = vpop.f32.mrf.mxu0
    %v3316 = vpop.f32.mrf.mxu0
    %3317 = vdwg.mxu0
    %v3318 = vmax.f32 %v3313, 0.0
    %v3319 = vld [vmem:[#allocation9 + $0xc08] sm:$0xf]
    %v3320 = vld [vmem:[#allocation9 + $0xc20] sm:$0xf]
    %v3321 = vld [vmem:[#allocation9 + $0xc38] sm:$0xf]
    %v3322 = vld [vmem:[#allocation9 + $0xc50] sm:$0xf]
    %v3323 = vld [vmem:[#allocation9 + $0xc68] sm:$0xf]
    %v3324 = vld [vmem:[#allocation9 + $0xc80] sm:$0xf]
    %v3325 = vld [vmem:[#allocation9 + $0xc98] sm:$0xf]
    %v3326 = vld [vmem:[#allocation9 + $0xcb0] sm:$0xf]
    %v3327 = vld [vmem:[#allocation9 + $0xcc8] sm:$0xf]
    %v3328 = vld [vmem:[#allocation9 + $0xce0] sm:$0xf]
    %v3329 = vld [vmem:[#allocation9 + $0xcf8] sm:$0xf]
    %v3330 = vld [vmem:[#allocation9 + $0xd10] sm:$0xf]
    %v3331 = vld [vmem:[#allocation9 + $0xd28] sm:$0xf]
    %v3332 = vld [vmem:[#allocation9 + $0xd40] sm:$0xf]
    %v3333 = vld [vmem:[#allocation9 + $0xd58] sm:$0xf]
    %v3334 = vld [vmem:[#allocation9 + $0xd70] sm:$0xf]
    %v3335 = vpack.c.bf16 %v3318, %v3318
    %v3336 = vld [vmem:[#allocation10 + $0x12] ss:$0 sm:$0xff]
    %v3353 = vunpack.c.l.b16 %v3319
    %v3354 = vunpack.c.l.b16 %v3320
    %v3355 = vunpack.c.l.b16 %v3321
    %v3356 = vunpack.c.l.b16 %v3322
    %v3357 = vunpack.c.l.b16 %v3323
    %v3358 = vunpack.c.l.b16 %v3324
    %v3359 = vunpack.c.l.b16 %v3325
    %v3360 = vunpack.c.l.b16 %v3326
    %v3361 = vunpack.c.l.b16 %v3327
    %v3362 = vunpack.c.l.b16 %v3328
    %v3363 = vunpack.c.l.b16 %v3329
    %v3364 = vunpack.c.l.b16 %v3330
    %v3365 = vunpack.c.l.b16 %v3331
    %v3366 = vunpack.c.l.b16 %v3332
    %v3367 = vunpack.c.l.b16 %v3333
    %v3368 = vunpack.c.l.b16 %v3334
    %v3369 = vpack.c.b16 %v3354, %v3353
    %v3370 = vpack.c.b16 %v3356, %v3355
    %v3371 = vpack.c.b16 %v3358, %v3357
    %v3372 = vpack.c.b16 %v3360, %v3359
    %v3373 = vpack.c.b16 %v3362, %v3361
    %v3374 = vpack.c.b16 %v3364, %v3363
    %v3375 = vpack.c.b16 %v3366, %v3365
    %v3376 = vpack.c.b16 %v3368, %v3367
    %3385 = vmatprep.subr.bf16.mxu0 0
    %3386 = vmatpush1.bf16.msra.mxu0 %v3376
    %3387 = vmatprep.subr.bf16.mxu0 0
    %3388 = vmatpush1.bf16.msra.mxu0 %v3375
    %3389 = vmatprep.subr.bf16.mxu0 0
    %3390 = vmatpush1.bf16.msra.mxu0 %v3374
    %3391 = vmatprep.subr.bf16.mxu0 0
    %3392 = vmatpush1.bf16.msra.mxu0 %v3373
    %3393 = vmatprep.subr.bf16.mxu0 0
    %3394 = vmatpush1.bf16.msra.mxu0 %v3372
    %3395 = vmatprep.subr.bf16.mxu0 0
    %3396 = vmatpush1.bf16.msra.mxu0 %v3371
    %3397 = vmatprep.subr.bf16.mxu0 0
    %3398 = vmatpush1.bf16.msra.mxu0 %v3370
    %3399 = vmatprep.subr.bf16.mxu0 0
    %3400 = vmatpush1.bf16.msra.mxu0 %v3369
    %3401 = vmatprep.subr.bf16.mxu0 0
    %3402 = vmatpush2.bf16.msra.mxu0 0
    %3403 = vmatprep.subr.bf16.mxu0 0
    %3404 = vmatpush2.bf16.msra.mxu0 0
    %3405 = vmatprep.subr.bf16.mxu0 0
    %3406 = vmatpush2.bf16.msra.mxu0 0
    %3407 = vmatprep.subr.bf16.mxu0 0
    %3408 = vmatpush2.bf16.msra.mxu0 0
    %3409 = vmatprep.subr.bf16.mxu0 0
    %3410 = vmatpush2.bf16.msra.mxu0 0
    %3411 = vmatprep.subr.bf16.mxu0 0
    %3412 = vmatpush2.bf16.msra.mxu0 0
    %3413 = vmatprep.subr.bf16.mxu0 0
    %3414 = vmatpush2.bf16.msra.mxu0 0
    %3415 = vmatprep.subr.bf16.mxu0 0
    %3416 = vmatpush2.bf16.msra.mxu0 0
    %3417 = vmatprep.mubr.bf16.mxu0 0
    %3418 = vmatmul.mubr.bf16.gmra.mxu0 %v3335
    %v3419 = vpop.f32.mrf.mxu0
    %v3420 = vadd.f32 %v3336, %v3419
    %v3421 = vpop.f32.mrf.mxu0
    %v3422 = vpop.f32.mrf.mxu0
    %v3423 = vpop.f32.mrf.mxu0
    %3424 = vdwg.mxu0
    %v3425 = vxor.u32 %v3420, 2147483648
    %v3426 = vmul.f32 %v3425, 1.442695
    %v3427 = vpow.pop %v3426
    %v3428 = vadd.f32 %v3427, 1.0
    %v3429 = vrcp.pop %v3428
    %v3430 = vmul.f32 1.0, %v3429
    %vm3431 = vcmask 7168
    %3432 = vst.msk [vmem:[%s6] sm:$0xff] %vm3431, %v3430
    // Predicated region
    $region50: #{model_forward.1} parent=1 // pred_check
      _
    $region51: #{model_forward.1} parent=1 // pred_check_branch
      %3434 = sbr.rel (0) target = $region53
    $region52: #{model_forward.1} parent=1 // pred_region
      _
    $region53: #{model_forward.1} parent=1 // pred_fallthru
      _
    // Predicated region
    $region54: #{model_forward.1} parent=1 // pred_check
      _
    $region55: #{model_forward.1} parent=1 // pred_check_branch
      %3436 = sbr.rel (0) target = $region57
    $region56: #{model_forward.1} parent=1 // pred_region
      _
    $region57: #{model_forward.1} parent=1 // pred_fallthru
      _
    %3437 = vsyncpa [#allocation3], 1
    %3438 = vsyncpa [#allocation5], 1
    %3439 = vsyncpa [#allocation8], 1
    %3440 = vsyncpa [#allocation11], 1

</llo_original>
